<compile_context>
chip_gen: v5e
topology: v5e:2x2
jax: 0.10.0
libtpu: 0.0.40
codegen_flags: <defaults>
</compile_context>

<pallas_src>
import jax
import jax.numpy as jnp
from jax.experimental import pallas as pl
from jax.experimental.pallas import tpu as pltpu

# Hyperparameters from NetTGCN.__init__
F1, G1, K1, H1 = 1, 32, 25, 15        # conv1: ChebTimeConv(1 -> 32, K=25, H=15)
G2, K2 = 64, 25                       # conv2: ChebConv(32 -> 64, K=25)
C_OUT = 6                             # fc1: Linear(N * 64, 6)


def net_tgcn_kernel(x_ref, a1_ref, b1_ref, a2_ref, b2_ref, fcw_ref, fcb_ref,
                    out_ref):
    # x_ref  : (B, N*TP)     input, node-major flatten of (B, N, T) padded to TP
    # a1_ref : (N*TP, N*G1)  folded conv1 operator  sum_k T_k ⊗ W1_k
    # b1_ref : (1, N*G1)     conv1 bias tiled over nodes
    # a2_ref : (N*G1, N*G2)  folded conv2 operator  sum_k T_k ⊗ W2_k
    # b2_ref : (1, N*G2)     conv2 bias tiled over nodes
    # fcw_ref: (N*G2, C)     fc1 weight, (in, out) layout
    # fcb_ref: (1, C)        fc1 bias
    # out_ref: (B, C)        log_softmax output
    f32 = jnp.float32

    # ---- conv1 (Chebyshev graph conv x temporal filter) + ReLU ------------
    y1 = jnp.dot(x_ref[...], a1_ref[...], preferred_element_type=f32)
    y1 = jnp.maximum(y1 + b1_ref[...], 0.0)                       # (B, N*G1)

    # ---- conv2 (Chebyshev graph conv) + ReLU -------------------------------
    y2 = jnp.dot(y1, a2_ref[...], preferred_element_type=f32)
    y2 = jnp.maximum(y2 + b2_ref[...], 0.0)                       # (B, N*G2)

    # ---- fc1 on the node-major flatten (y2 is already node-major) ----------
    logits = jnp.dot(y2, fcw_ref[...], preferred_element_type=f32) \
        + fcb_ref[...]                                            # (B, C)

    # ---- log_softmax over classes (dim=1), batched --------------------------
    mx = jnp.max(logits, axis=-1, keepdims=True)
    lse = jnp.log(jnp.sum(jnp.exp(logits - mx), axis=-1, keepdims=True)) + mx
    out_ref[...] = logits - lse


@jax.jit
def net_tgcn_forward(x, lhat, w1, b1, w2, b2, fcw, fcb):
    """x: (B, N, T); lhat: (N, N) scaled normalized Laplacian; w1: (K, H, G1);
    b1: (G1,); w2: (K, G1, G2); b2: (G2,); fcw: (N*G2, C) [(in, out) layout,
    i.e. torch fc1.weight transposed]; fcb: (C,)."""
    f32 = jnp.float32
    hp = jax.lax.Precision.HIGHEST
    B, N, T = x.shape
    K, H, G1_ = w1.shape
    G2_ = w2.shape[-1]
    C = fcw.shape[-1]
    assert T == H, "valid temporal filter: input time length must equal H"
    TP = H + 1  # pad 15 -> 16 so the input's lane flatten is 128-aligned

    # ---- layout plumbing + operator fold (all in XLA, outside the kernel) ---
    # Chebyshev basis T_0..T_{K-1} of the scaled Laplacian, full precision.
    lhat = lhat.astype(f32)
    t_prev = jnp.eye(N, dtype=f32)
    t_cur = lhat
    ts = [t_prev, t_cur]
    for _ in range(2, K):
        t_next = 2.0 * jnp.dot(lhat, t_cur, precision=hp) - t_prev
        ts.append(t_next)
        t_prev, t_cur = t_cur, t_next
    tstack = jnp.stack(ts, 0)                                       # (K, N, N)

    # Folded per-layer operators (rows = input (node, feat), cols = output).
    w1p = jnp.pad(w1.astype(f32), ((0, 0), (0, TP - H), (0, 0)))    # (K, TP, G1)
    a1 = jnp.einsum('knm,ktg->mtng', tstack, w1p,
                    precision=hp).reshape(N * TP, N * G1_)          # (N*TP, N*G1)
    a2 = jnp.einsum('knm,kcg->mcng', tstack, w2.astype(f32),
                    precision=hp).reshape(N * G1_, N * G2_)         # (N*G1, N*G2)

    x2 = jnp.pad(x.astype(f32), ((0, 0), (0, 0), (0, TP - T)))
    x2 = x2.reshape(B, N * TP)                                      # (B, N*TP)
    b1t = jnp.tile(b1.astype(f32), N).reshape(1, N * G1_)
    b2t = jnp.tile(b2.astype(f32), N).reshape(1, N * G2_)

    vmem = pl.BlockSpec(memory_space=pltpu.MemorySpace.VMEM)
    # Problem is tiny (~2.6 MB resident in VMEM) -> single gridless invocation.
    return pl.pallas_call(
        net_tgcn_kernel,
        out_shape=jax.ShapeDtypeStruct((B, C), f32),
        in_specs=[vmem] * 7,
        out_specs=vmem,
    )(x2, a1, b1t, a2, b2t,
      fcw.astype(f32), fcb.astype(f32).reshape(1, C))


def net_tgcn_reference(x, lhat, w1, b1, w2, b2, fcw, fcb):
    """Pure-JAX reference (float32, HIGHEST matmul precision)."""
    hp = jax.lax.Precision.HIGHEST
    B, N, T = x.shape
    K = w1.shape[0]

    def cheb(inp):                       # inp: (B, N, F) -> (K, B, N, F)
        zs = [inp, jnp.einsum('uv,bvf->buf', lhat, inp, precision=hp)]
        for _ in range(2, K):
            zs.append(2.0 * jnp.einsum('uv,bvf->buf', lhat, zs[-1],
                                       precision=hp) - zs[-2])
        return jnp.stack(zs, 0)

    z1 = cheb(x)                                                     # (K,B,N,T)
    y1 = jnp.maximum(jnp.einsum('kbnt,ktg->bng', z1, w1, precision=hp) + b1, 0.0)
    z2 = cheb(y1)                                                    # (K,B,N,G1)
    y2 = jnp.maximum(jnp.einsum('kbnc,kcg->bng', z2, w2, precision=hp) + b2, 0.0)
    logits = jnp.dot(y2.reshape(B, -1), fcw, precision=hp) + fcb
    return jax.nn.log_softmax(logits, axis=-1)


if __name__ == "__main__":
    B, N = 2, 16                      # batch, graph nodes (n2 = graphs[0].shape[0])
    T = H1                            # time length == H -> conv1 time dim -> 1
    key = jax.random.PRNGKey(0)
    kx, kw1, kb1, kw2, kb2, kfw, kfb = jax.random.split(key, 7)

    x = jax.random.normal(kx, (B, N, T), dtype=jnp.float32)

    # Deterministic ring graph -> scaled normalized Laplacian (lambda_max = 2):
    #   L_hat = 2*(I - D^-1/2 A D^-1/2)/lmax - I = -D^-1/2 A D^-1/2
    idx = jnp.arange(N)
    adj = jnp.zeros((N, N), jnp.float32)
    adj = adj.at[idx, (idx + 1) % N].set(1.0)
    adj = adj.at[(idx + 1) % N, idx].set(1.0)
    dinv = 1.0 / jnp.sqrt(jnp.sum(adj, axis=1))
    lhat = -(dinv[:, None] * adj * dinv[None, :])

    # Synthetic parameters (shapes from the module; real torch Linear weights
    # are (out, in) and would need a transpose into this (in, out) layout).
    w1 = jax.random.normal(kw1, (K1, H1, G1), jnp.float32) / (K1 * H1) ** 0.5
    b1 = jax.random.normal(kb1, (G1,), jnp.float32) * 0.01
    w2 = jax.random.normal(kw2, (K2, G1, G2), jnp.float32) / (K2 * G1) ** 0.5
    b2 = jax.random.normal(kb2, (G2,), jnp.float32) * 0.01
    fcw = jax.random.normal(kfw, (N * G2, C_OUT), jnp.float32) / (N * G2) ** 0.5
    fcb = jax.random.normal(kfb, (C_OUT,), jnp.float32) * 0.01

    out = net_tgcn_forward(x, lhat, w1, b1, w2, b2, fcw, fcb)
    jax.block_until_ready(out)
    assert out.shape == (B, C_OUT) and out.dtype == jnp.float32

    ref = net_tgcn_reference(x, lhat, w1, b1, w2, b2, fcw, fcb)
    err = float(jnp.max(jnp.abs(out - ref)))
    assert err < 2e-2, f"kernel/reference mismatch: max abs err = {err}"
    print("KERNEL_OK")
</pallas_src>

<mosaic_0001>
module attributes {stable_mosaic.version = 11 : i64} {
  func.func @net_tgcn_kernel(%arg0: memref<2x256xf32, #tpu.memory_space<vmem>>, %arg1: memref<256x512xf32, #tpu.memory_space<vmem>>, %arg2: memref<1x512xf32, #tpu.memory_space<vmem>>, %arg3: memref<512x1024xf32, #tpu.memory_space<vmem>>, %arg4: memref<1x1024xf32, #tpu.memory_space<vmem>>, %arg5: memref<1024x6xf32, #tpu.memory_space<vmem>>, %arg6: memref<1x6xf32, #tpu.memory_space<vmem>>, %arg7: memref<2x6xf32, #tpu.memory_space<vmem>>) attributes {dimension_semantics = [], scalar_prefetch = 0 : i64, scratch_operands = 0 : i64, tpu.core_type = #tpu.core_type<tc>} {
    %c0 = arith.constant 0 : index
    %c0_0 = arith.constant 0 : index
    %0 = vector.load %arg0[%c0, %c0_0] : memref<2x256xf32, #tpu.memory_space<vmem>>, vector<2x256xf32>
    %c0_1 = arith.constant 0 : index
    %c0_2 = arith.constant 0 : index
    %1 = vector.load %arg1[%c0_1, %c0_2] : memref<256x512xf32, #tpu.memory_space<vmem>>, vector<256x512xf32>
    %cst = arith.constant dense<0.000000e+00> : vector<2x512xf32>
    %2 = tpu.matmul %0, %1, %cst {dimension_numbers = #tpu.dot_dimension_numbers<[1], [0], [0], [1], [0, 0, 1, 1], [], []>} : vector<2x256xf32>, vector<256x512xf32>, vector<2x512xf32> -> vector<2x512xf32>
    %c0_3 = arith.constant 0 : index
    %c0_4 = arith.constant 0 : index
    %3 = vector.load %arg2[%c0_3, %c0_4] : memref<1x512xf32, #tpu.memory_space<vmem>>, vector<1x512xf32>
    %4 = vector.broadcast %3 : vector<1x512xf32> to vector<2x512xf32>
    %5 = arith.addf %2, %4 : vector<2x512xf32>
    %cst_5 = arith.constant 0.000000e+00 : f32
    %6 = vector.broadcast %cst_5 : f32 to vector<2x512xf32>
    %7 = arith.maximumf %5, %6 : vector<2x512xf32>
    %c0_6 = arith.constant 0 : index
    %c0_7 = arith.constant 0 : index
    %8 = vector.load %arg3[%c0_6, %c0_7] : memref<512x1024xf32, #tpu.memory_space<vmem>>, vector<512x1024xf32>
    %cst_8 = arith.constant dense<0.000000e+00> : vector<2x1024xf32>
    %9 = tpu.matmul %7, %8, %cst_8 {dimension_numbers = #tpu.dot_dimension_numbers<[1], [0], [0], [1], [0, 0, 1, 1], [], []>} : vector<2x512xf32>, vector<512x1024xf32>, vector<2x1024xf32> -> vector<2x1024xf32>
    %c0_9 = arith.constant 0 : index
    %c0_10 = arith.constant 0 : index
    %10 = vector.load %arg4[%c0_9, %c0_10] : memref<1x1024xf32, #tpu.memory_space<vmem>>, vector<1x1024xf32>
    %11 = vector.broadcast %10 : vector<1x1024xf32> to vector<2x1024xf32>
    %12 = arith.addf %9, %11 : vector<2x1024xf32>
    %cst_11 = arith.constant 0.000000e+00 : f32
    %13 = vector.broadcast %cst_11 : f32 to vector<2x1024xf32>
    %14 = arith.maximumf %12, %13 : vector<2x1024xf32>
    %c0_12 = arith.constant 0 : index
    %c0_13 = arith.constant 0 : index
    %15 = vector.load %arg5[%c0_12, %c0_13] : memref<1024x6xf32, #tpu.memory_space<vmem>>, vector<1024x6xf32>
    %cst_14 = arith.constant dense<0.000000e+00> : vector<2x6xf32>
    %16 = tpu.matmul %14, %15, %cst_14 {dimension_numbers = #tpu.dot_dimension_numbers<[1], [0], [0], [1], [0, 0, 1, 1], [], []>} : vector<2x1024xf32>, vector<1024x6xf32>, vector<2x6xf32> -> vector<2x6xf32>
    %c0_15 = arith.constant 0 : index
    %c0_16 = arith.constant 0 : index
    %17 = vector.load %arg6[%c0_15, %c0_16] : memref<1x6xf32, #tpu.memory_space<vmem>>, vector<1x6xf32>
    %18 = vector.broadcast %17 : vector<1x6xf32> to vector<2x6xf32>
    %19 = arith.addf %16, %18 : vector<2x6xf32>
    %cst_17 = arith.constant dense<0xFF800000> : vector<2xf32>
    %20 = vector.multi_reduction <maximumf>, %19, %cst_17 [1] : vector<2x6xf32> to vector<2xf32>
    %21 = vector.shape_cast %20 : vector<2xf32> to vector<2x1xf32>
    %22 = vector.broadcast %21 : vector<2x1xf32> to vector<2x6xf32>
    %23 = arith.subf %19, %22 : vector<2x6xf32>
    %24 = math.exp %23 : vector<2x6xf32>
    %cst_18 = arith.constant dense<0.000000e+00> : vector<2xf32>
    %25 = vector.multi_reduction <add>, %24, %cst_18 [1] : vector<2x6xf32> to vector<2xf32>
    %26 = vector.shape_cast %25 : vector<2xf32> to vector<2x1xf32>
    %27 = math.log %26 : vector<2x1xf32>
    %28 = arith.addf %27, %21 : vector<2x1xf32>
    %29 = vector.broadcast %28 : vector<2x1xf32> to vector<2x6xf32>
    %30 = arith.subf %19, %29 : vector<2x6xf32>
    %c0_19 = arith.constant 0 : index
    %c0_20 = arith.constant 0 : index
    %31 = vector.load %arg7[%c0_19, %c0_20] : memref<2x6xf32, #tpu.memory_space<vmem>>, vector<2x6xf32>
    tpu.vector_store %arg7[%c0_19, %c0_20], %30 {strides = array<i32>} : memref<2x6xf32, #tpu.memory_space<vmem>>, vector<2x6xf32>,
    return
  }
}

</mosaic_0001>

<llo_original>
// kernel: tile.18
$region0: #{tile.18}
  #allocation0 [shape = 's32[1]{0}', space=sflag, size = 0x4, scoped, tag = 'scoped memory for tile.18']
  %s0 = inlined_call_operand.vmem [shape: f32[64], index: 0, kind: input, shape index: {}]
  %s1 = inlined_call_operand.vmem [shape: f32[16,64], index: 1, kind: output, shape index: {}]
  // Predicated region
  $region2: #{tile.18} parent=0 // pred_check
    _
  $region3: #{tile.18} parent=0 // pred_check_branch
    %3 = sbr.rel (0) target = $region5
  $region4: #{tile.18} parent=0 // pred_region
    _
  $region5: #{tile.18} parent=0 // pred_fallthru
    _
  %v4 = vld [vmem:[%s0] ss:$0 sm:$0xff]
  %5 = vst [vmem:[%s1] sm:$0xff] %v4
  %s6 = scalar_lea.vmem %s1, 8
  %7 = vst [vmem:[%s6] sm:$0xff] %v4

// kernel: tile.19
$region0: #{tile.19}
  %s0 = inlined_call_operand.vmem [shape: f32[16,64], index: 0, kind: input, shape index: {}]
  %s1 = inlined_call_operand.vmem [shape: f32[1,1024], index: 1, kind: output, shape index: {}]
  $region1: #{tile.19} parent=0
    #allocation0 [shape = 'u8[32768]{0}', space=vmem, size = 0x8000, scoped, tag = 'scoped mem for output reshape']
    %v2 = vld [vmem:[%s0] ss:$2 sm:$0xff]
    %vm3 = vcmask 523264
    %4 = vst.msk [vmem:[#allocation0] ss:$8 sm:$0xf] %vm3, %v2
    %5 = vst.msk [vmem:[#allocation0] ss:$8 sm:$0xf0] %vm3, %v2
    %s6 = scalar_lea.vmem %s0, 1
    %v7 = vld [vmem:[%s6] ss:$2 sm:$0xff]
    %8 = vrot.lane.b32.xlu0 %v7, 64
    %v9 = vpop.permute.xlu0 %8
    %vm10 = vcmask 1048064
    %11 = vst.msk [vmem:[#allocation0] ss:$8 sm:$0xf] %vm10, %v9
    %12 = vst.msk [vmem:[#allocation0] ss:$8 sm:$0xf0] %vm10, %v9
    %s14 = ssub.s32 2, 1
    %v15 = vld [vmem:[#allocation0] sm:%s14]
    %s17 = ssub.s32 2, 1
    %18 = vst [vmem:[%s1] sm:%s17] %v15
    %s19 = scalar_lea.vmem [#allocation0], 8
    %v20 = vld [vmem:[%s19] sm:%s14]
    %s22 = ssub.s32 2, 1
    %s23 = scalar_lea.vmem %s1, 1
    %24 = vst [vmem:[%s23] sm:%s22] %v20
    %s25 = scalar_lea.vmem [#allocation0], 16
    %v26 = vld [vmem:[%s25] sm:%s14]
    %s28 = ssub.s32 2, 1
    %s29 = scalar_lea.vmem %s1, 2
    %30 = vst [vmem:[%s29] sm:%s28] %v26
    %s31 = scalar_lea.vmem [#allocation0], 24
    %v32 = vld [vmem:[%s31] sm:%s14]
    %s34 = ssub.s32 2, 1
    %s35 = scalar_lea.vmem %s1, 3
    %36 = vst [vmem:[%s35] sm:%s34] %v32
    %s37 = scalar_lea.vmem [#allocation0], 32
    %v38 = vld [vmem:[%s37] sm:%s14]
    %s40 = ssub.s32 2, 1
    %s41 = scalar_lea.vmem %s1, 4
    %42 = vst [vmem:[%s41] sm:%s40] %v38
    %s43 = scalar_lea.vmem [#allocation0], 40
    %v44 = vld [vmem:[%s43] sm:%s14]
    %s46 = ssub.s32 2, 1
    %s47 = scalar_lea.vmem %s1, 5
    %48 = vst [vmem:[%s47] sm:%s46] %v44
    %s49 = scalar_lea.vmem [#allocation0], 48
    %v50 = vld [vmem:[%s49] sm:%s14]
    %s52 = ssub.s32 2, 1
    %s53 = scalar_lea.vmem %s1, 6
    %54 = vst [vmem:[%s53] sm:%s52] %v50
    %s55 = scalar_lea.vmem [#allocation0], 56
    %v56 = vld [vmem:[%s55] sm:%s14]
    %s58 = ssub.s32 2, 1
    %s59 = scalar_lea.vmem %s1, 7
    %60 = vst [vmem:[%s59] sm:%s58] %v56

// kernel: tile.13
$region0: #{tile.13}
  #allocation0 [shape = 's32[1]{0}', space=sflag, size = 0x4, scoped, tag = 'scoped memory for tile.13']
  %s0 = inlined_call_operand.vmem [shape: f32[32], index: 0, kind: input, shape index: {}]
  %s1 = inlined_call_operand.vmem [shape: f32[16,32], index: 1, kind: output, shape index: {}]
  // Predicated region
  $region2: #{tile.13} parent=0 // pred_check
    _
  $region3: #{tile.13} parent=0 // pred_check_branch
    %3 = sbr.rel (0) target = $region5
  $region4: #{tile.13} parent=0 // pred_region
    _
  $region5: #{tile.13} parent=0 // pred_fallthru
    _
  %v4 = vld [vmem:[%s0] ss:$0 sm:$0xff]
  %5 = vst [vmem:[%s1] sm:$0xff] %v4
  %s6 = scalar_lea.vmem %s1, 8
  %7 = vst [vmem:[%s6] sm:$0xff] %v4

// kernel: tile.14
$region0: #{tile.14}
  %s0 = inlined_call_operand.vmem [shape: f32[16,32], index: 0, kind: input, shape index: {}]
  %s1 = inlined_call_operand.vmem [shape: f32[1,512], index: 1, kind: output, shape index: {}]
  $region1: #{tile.14} parent=0
    #allocation0 [shape = 'u8[16384]{0}', space=vmem, size = 0x4000, scoped, tag = 'scoped mem for output reshape']
    %v2 = vld [vmem:[%s0] ss:$4 sm:$0xf]
    %vm3 = vcmask 261120
    %4 = vst.msk [vmem:[#allocation0] ss:$8 sm:$0xf] %vm3, %v2
    %s5 = scalar_lea.vmem %s0, 3
    %v6 = vld [vmem:[%s5] ss:$4 sm:$0xf]
    %7 = vrot.lane.b32.xlu0 %v6, 96
    %v8 = vpop.permute.xlu0 %7
    %vm9 = vcmask 1048320
    %10 = vst.msk [vmem:[#allocation0] ss:$8 sm:$0xf] %vm9, %v8
    %s11 = scalar_lea.vmem %s0, 2
    %v12 = vld [vmem:[%s11] ss:$4 sm:$0xf]
    %13 = vrot.lane.b32.xlu0 %v12, 64
    %v14 = vpop.permute.xlu0 %13
    %vm15 = vcmask 785920
    %16 = vst.msk [vmem:[#allocation0] ss:$8 sm:$0xf] %vm15, %v14
    %s17 = scalar_lea.vmem %s0, 1
    %v18 = vld [vmem:[%s17] ss:$4 sm:$0xf]
    %19 = vrot.lane.b32.xlu0 %v18, 32
    %v20 = vpop.permute.xlu0 %19
    %vm21 = vcmask 523520
    %22 = vst.msk [vmem:[#allocation0] ss:$8 sm:$0xf] %vm21, %v20
    %s24 = ssub.s32 2, 1
    %v25 = vld [vmem:[#allocation0] sm:%s24]
    %s27 = ssub.s32 2, 1
    %28 = vst [vmem:[%s1] sm:%s27] %v25
    %s29 = scalar_lea.vmem [#allocation0], 8
    %v30 = vld [vmem:[%s29] sm:%s24]
    %s32 = ssub.s32 2, 1
    %s33 = scalar_lea.vmem %s1, 1
    %34 = vst [vmem:[%s33] sm:%s32] %v30
    %s35 = scalar_lea.vmem [#allocation0], 16
    %v36 = vld [vmem:[%s35] sm:%s24]
    %s38 = ssub.s32 2, 1
    %s39 = scalar_lea.vmem %s1, 2
    %40 = vst [vmem:[%s39] sm:%s38] %v36
    %s41 = scalar_lea.vmem [#allocation0], 24
    %v42 = vld [vmem:[%s41] sm:%s24]
    %s44 = ssub.s32 2, 1
    %s45 = scalar_lea.vmem %s1, 3
    %46 = vst [vmem:[%s45] sm:%s44] %v42

// kernel: net_tgcn_forward.1
$region0: #{net_tgcn_forward.1}
  #allocation0 [shape = 'u32[]', space=smem, size = 0x4, offset = 0x4, fixed_abs, tag = 'smem constant byte address 0x4 - core index']
  #allocation1 [shape = 'u32[72,128]{1,0:T(1,128)}', space=vmem, size = 0x9000, scoped, tag = 'internal scratch']
  %s0 = inlined_call_operand.vmem [shape: f32[2,256], index: 0, kind: input, shape index: {}]
  %s1 = inlined_call_operand.vmem [shape: f32[256,512], index: 1, kind: input, shape index: {}]
  %s2 = inlined_call_operand.vmem [shape: f32[1,512], index: 2, kind: input, shape index: {}]
  %s3 = inlined_call_operand.vmem [shape: f32[512,1024], index: 3, kind: input, shape index: {}]
  %s4 = inlined_call_operand.vmem [shape: f32[1,1024], index: 4, kind: input, shape index: {}]
  %s5 = inlined_call_operand.vmem [shape: f32[1024,6], index: 5, kind: input, shape index: {}]
  %s6 = inlined_call_operand.vmem [shape: f32[1,6], index: 6, kind: input, shape index: {}]
  %s7 = inlined_call_operand.hbm [shape: f32[2,6], index: 7, kind: output, shape index: {}]
  %s8 = sld [smem:[#allocation0]]
  $region38: #{net_tgcn_forward.1} parent=0
    _
  %s10 = ssub.s32 1, %s8
  %s11 = scalar_select 0, %s10, %s8
  $region1: #{net_tgcn_forward.1} parent=0
    #allocation2 [shape = 'u8[1024]{0}', space=vmem, size = 0x400, scoped, tag = 'output window, operand 0, single buffered']
    #allocation3 [shape = 's32[1]{0}', space=sflag, size = 0x4, scoped, tag = 'scoped memory for net_tgcn_forward.1']
    %12 = vsyncpa [#allocation3], 0
    // Predicated region
    $region2: #{net_tgcn_forward.1} parent=1 // pred_check
      _
    $region3: #{net_tgcn_forward.1} parent=1 // pred_check_branch
      %14 = sbr.rel (0) target = $region5
    $region4: #{net_tgcn_forward.1} parent=1 // pred_region
      _
    $region5: #{net_tgcn_forward.1} parent=1 // pred_fallthru
      _
    // Predicated region
    $region6: #{net_tgcn_forward.1} parent=1 // pred_check
      _
    $region7: #{net_tgcn_forward.1} parent=1 // pred_check_branch
      %16 = sbr.rel (0) target = $region9
    $region8: #{net_tgcn_forward.1} parent=1 // pred_region
      _
    $region9: #{net_tgcn_forward.1} parent=1 // pred_fallthru
      _
    // Predicated region
    $region10: #{net_tgcn_forward.1} parent=1 // pred_check
      _
    $region11: #{net_tgcn_forward.1} parent=1 // pred_check_branch
      %18 = sbr.rel (0) target = $region13
    $region12: #{net_tgcn_forward.1} parent=1 // pred_region
      _
    $region13: #{net_tgcn_forward.1} parent=1 // pred_fallthru
      _
    // Predicated region
    $region14: #{net_tgcn_forward.1} parent=1 // pred_check
      _
    $region15: #{net_tgcn_forward.1} parent=1 // pred_check_branch
      %20 = sbr.rel (0) target = $region17
    $region16: #{net_tgcn_forward.1} parent=1 // pred_region
      _
    $region17: #{net_tgcn_forward.1} parent=1 // pred_fallthru
      _
    // Predicated region
    $region18: #{net_tgcn_forward.1} parent=1 // pred_check
      _
    $region19: #{net_tgcn_forward.1} parent=1 // pred_check_branch
      %22 = sbr.rel (0) target = $region21
    $region20: #{net_tgcn_forward.1} parent=1 // pred_region
      _
    $region21: #{net_tgcn_forward.1} parent=1 // pred_fallthru
      _
    // Predicated region
    $region22: #{net_tgcn_forward.1} parent=1 // pred_check
      _
    $region23: #{net_tgcn_forward.1} parent=1 // pred_check_branch
      %24 = sbr.rel (0) target = $region25
    $region24: #{net_tgcn_forward.1} parent=1 // pred_region
      _
    $region25: #{net_tgcn_forward.1} parent=1 // pred_fallthru
      _
    // Predicated region
    $region26: #{net_tgcn_forward.1} parent=1 // pred_check
      _
    $region27: #{net_tgcn_forward.1} parent=1 // pred_check_branch
      %26 = sbr.rel (0) target = $region29
    $region28: #{net_tgcn_forward.1} parent=1 // pred_region
      _
    $region29: #{net_tgcn_forward.1} parent=1 // pred_fallthru
      _
    %v27 = vld [vmem:[%s0] sm:$0xf]
    %v28 = vld [vmem:[%s1] sm:$0xff]
    %v29 = vld [vmem:[%s1 + $0x8] sm:$0xff]
    %v30 = vld [vmem:[%s1 + $0x10] sm:$0xff]
    %v31 = vld [vmem:[%s1 + $0x18] sm:$0xff]
    %v32 = vld [vmem:[%s1 + $0x20] sm:$0xff]
    %v33 = vld [vmem:[%s1 + $0x28] sm:$0xff]
    %v34 = vld [vmem:[%s1 + $0x30] sm:$0xff]
    %v35 = vld [vmem:[%s1 + $0x38] sm:$0xff]
    %v36 = vld [vmem:[%s1 + $0x40] sm:$0xff]
    %v37 = vld [vmem:[%s1 + $0x48] sm:$0xff]
    %v38 = vld [vmem:[%s1 + $0x50] sm:$0xff]
    %v39 = vld [vmem:[%s1 + $0x58] sm:$0xff]
    %v40 = vld [vmem:[%s1 + $0x60] sm:$0xff]
    %v41 = vld [vmem:[%s1 + $0x68] sm:$0xff]
    %v42 = vld [vmem:[%s1 + $0x70] sm:$0xff]
    %v43 = vld [vmem:[%s1 + $0x78] sm:$0xff]
    %v44 = vld [vmem:[%s1 + $0x80] sm:$0xff]
    %v45 = vld [vmem:[%s1 + $0x88] sm:$0xff]
    %v46 = vld [vmem:[%s1 + $0x90] sm:$0xff]
    %v47 = vld [vmem:[%s1 + $0x98] sm:$0xff]
    %v48 = vld [vmem:[%s1 + $0xa0] sm:$0xff]
    %v49 = vld [vmem:[%s1 + $0xa8] sm:$0xff]
    %v50 = vld [vmem:[%s1 + $0xb0] sm:$0xff]
    %v51 = vld [vmem:[%s1 + $0xb8] sm:$0xff]
    %v52 = vld [vmem:[%s1 + $0xc0] sm:$0xff]
    %v53 = vld [vmem:[%s1 + $0xc8] sm:$0xff]
    %v54 = vld [vmem:[%s1 + $0xd0] sm:$0xff]
    %v55 = vld [vmem:[%s1 + $0xd8] sm:$0xff]
    %v56 = vld [vmem:[%s1 + $0xe0] sm:$0xff]
    %v57 = vld [vmem:[%s1 + $0xe8] sm:$0xff]
    %v58 = vld [vmem:[%s1 + $0xf0] sm:$0xff]
    %v59 = vld [vmem:[%s1 + $0xf8] sm:$0xff]
    %v60 = vld [vmem:[%s1 + $0x100] sm:$0xff]
    %v61 = vld [vmem:[%s1 + $0x108] sm:$0xff]
    %v62 = vld [vmem:[%s1 + $0x110] sm:$0xff]
    %v63 = vld [vmem:[%s1 + $0x118] sm:$0xff]
    %v64 = vld [vmem:[%s1 + $0x120] sm:$0xff]
    %v65 = vld [vmem:[%s1 + $0x128] sm:$0xff]
    %v66 = vld [vmem:[%s1 + $0x130] sm:$0xff]
    %v67 = vld [vmem:[%s1 + $0x138] sm:$0xff]
    %v68 = vld [vmem:[%s1 + $0x140] sm:$0xff]
    %v69 = vld [vmem:[%s1 + $0x148] sm:$0xff]
    %v70 = vld [vmem:[%s1 + $0x150] sm:$0xff]
    %v71 = vld [vmem:[%s1 + $0x158] sm:$0xff]
    %v72 = vld [vmem:[%s1 + $0x160] sm:$0xff]
    %v73 = vld [vmem:[%s1 + $0x168] sm:$0xff]
    %v74 = vld [vmem:[%s1 + $0x170] sm:$0xff]
    %v75 = vld [vmem:[%s1 + $0x178] sm:$0xff]
    %v76 = vld [vmem:[%s1 + $0x180] sm:$0xff]
    %v77 = vld [vmem:[%s1 + $0x188] sm:$0xff]
    %v78 = vld [vmem:[%s1 + $0x190] sm:$0xff]
    %v79 = vld [vmem:[%s1 + $0x198] sm:$0xff]
    %v80 = vld [vmem:[%s1 + $0x1a0] sm:$0xff]
    %v81 = vld [vmem:[%s1 + $0x1a8] sm:$0xff]
    %v82 = vld [vmem:[%s1 + $0x1b0] sm:$0xff]
    %v83 = vld [vmem:[%s1 + $0x1b8] sm:$0xff]
    %v84 = vld [vmem:[%s1 + $0x1c0] sm:$0xff]
    %v85 = vld [vmem:[%s1 + $0x1c8] sm:$0xff]
    %v86 = vld [vmem:[%s1 + $0x1d0] sm:$0xff]
    %v87 = vld [vmem:[%s1 + $0x1d8] sm:$0xff]
    %v88 = vld [vmem:[%s1 + $0x1e0] sm:$0xff]
    %v89 = vld [vmem:[%s1 + $0x1e8] sm:$0xff]
    %v90 = vld [vmem:[%s1 + $0x1f0] sm:$0xff]
    %v91 = vld [vmem:[%s1 + $0x1f8] sm:$0xff]
    %v92 = vld [vmem:[%s1 + $0x200] sm:$0xff]
    %v93 = vld [vmem:[%s1 + $0x208] sm:$0xff]
    %v94 = vld [vmem:[%s1 + $0x210] sm:$0xff]
    %v95 = vld [vmem:[%s1 + $0x218] sm:$0xff]
    %v96 = vld [vmem:[%s1 + $0x220] sm:$0xff]
    %v97 = vld [vmem:[%s1 + $0x228] sm:$0xff]
    %v98 = vld [vmem:[%s1 + $0x230] sm:$0xff]
    %v99 = vld [vmem:[%s1 + $0x238] sm:$0xff]
    %v100 = vld [vmem:[%s1 + $0x240] sm:$0xff]
    %v101 = vld [vmem:[%s1 + $0x248] sm:$0xff]
    %v102 = vld [vmem:[%s1 + $0x250] sm:$0xff]
    %v103 = vld [vmem:[%s1 + $0x258] sm:$0xff]
    %v104 = vld [vmem:[%s1 + $0x260] sm:$0xff]
    %v105 = vld [vmem:[%s1 + $0x268] sm:$0xff]
    %v106 = vld [vmem:[%s1 + $0x270] sm:$0xff]
    %v107 = vld [vmem:[%s1 + $0x278] sm:$0xff]
    %v108 = vld [vmem:[%s1 + $0x280] sm:$0xff]
    %v109 = vld [vmem:[%s1 + $0x288] sm:$0xff]
    %v110 = vld [vmem:[%s1 + $0x290] sm:$0xff]
    %v111 = vld [vmem:[%s1 + $0x298] sm:$0xff]
    %v112 = vld [vmem:[%s1 + $0x2a0] sm:$0xff]
    %v113 = vld [vmem:[%s1 + $0x2a8] sm:$0xff]
    %v114 = vld [vmem:[%s1 + $0x2b0] sm:$0xff]
    %v115 = vld [vmem:[%s1 + $0x2b8] sm:$0xff]
    %v116 = vld [vmem:[%s1 + $0x2c0] sm:$0xff]
    %v117 = vld [vmem:[%s1 + $0x2c8] sm:$0xff]
    %v118 = vld [vmem:[%s1 + $0x2d0] sm:$0xff]
    %v119 = vld [vmem:[%s1 + $0x2d8] sm:$0xff]
    %v120 = vld [vmem:[%s1 + $0x2e0] sm:$0xff]
    %v121 = vld [vmem:[%s1 + $0x2e8] sm:$0xff]
    %v122 = vld [vmem:[%s1 + $0x2f0] sm:$0xff]
    %v123 = vld [vmem:[%s1 + $0x2f8] sm:$0xff]
    %v124 = vld [vmem:[%s1 + $0x300] sm:$0xff]
    %v125 = vld [vmem:[%s1 + $0x308] sm:$0xff]
    %v126 = vld [vmem:[%s1 + $0x310] sm:$0xff]
    %v127 = vld [vmem:[%s1 + $0x318] sm:$0xff]
    %v128 = vld [vmem:[%s1 + $0x320] sm:$0xff]
    %v129 = vld [vmem:[%s1 + $0x328] sm:$0xff]
    %v130 = vld [vmem:[%s1 + $0x330] sm:$0xff]
    %v131 = vld [vmem:[%s1 + $0x338] sm:$0xff]
    %v132 = vld [vmem:[%s1 + $0x340] sm:$0xff]
    %v133 = vld [vmem:[%s1 + $0x348] sm:$0xff]
    %v134 = vld [vmem:[%s1 + $0x350] sm:$0xff]
    %v135 = vld [vmem:[%s1 + $0x358] sm:$0xff]
    %v136 = vld [vmem:[%s1 + $0x360] sm:$0xff]
    %v137 = vld [vmem:[%s1 + $0x368] sm:$0xff]
    %v138 = vld [vmem:[%s1 + $0x370] sm:$0xff]
    %v139 = vld [vmem:[%s1 + $0x378] sm:$0xff]
    %v140 = vld [vmem:[%s1 + $0x380] sm:$0xff]
    %v141 = vld [vmem:[%s1 + $0x388] sm:$0xff]
    %v142 = vld [vmem:[%s1 + $0x390] sm:$0xff]
    %v143 = vld [vmem:[%s1 + $0x398] sm:$0xff]
    %v144 = vld [vmem:[%s1 + $0x3a0] sm:$0xff]
    %v145 = vld [vmem:[%s1 + $0x3a8] sm:$0xff]
    %v146 = vld [vmem:[%s1 + $0x3b0] sm:$0xff]
    %v147 = vld [vmem:[%s1 + $0x3b8] sm:$0xff]
    %v148 = vld [vmem:[%s1 + $0x3c0] sm:$0xff]
    %v149 = vld [vmem:[%s1 + $0x3c8] sm:$0xff]
    %v150 = vld [vmem:[%s1 + $0x3d0] sm:$0xff]
    %v151 = vld [vmem:[%s1 + $0x3d8] sm:$0xff]
    %v152 = vld [vmem:[%s1 + $0x3e0] sm:$0xff]
    %v153 = vld [vmem:[%s1 + $0x3e8] sm:$0xff]
    %v154 = vld [vmem:[%s1 + $0x3f0] sm:$0xff]
    %v155 = vld [vmem:[%s1 + $0x3f8] sm:$0xff]
    %v156 = vld [vmem:[%s2] sm:$0xf]
    %v158 = vperm.slane %v156, 0
    %v159 = vperm.slane %v156, 1
    %v160 = vperm.slane %v156, 2
    %v161 = vperm.slane %v156, 3
    %167 = vst [vmem:[#allocation1] ss:$4 sm:$0xff] %v27
    %v168 = vld.sshfl [vmem:[#allocation1] sm:$0xff pattern:$0x73625140]
    %v169 = vld.sshfl [vmem:[#allocation1 + $0x8] sm:$0xff pattern:$0x73625140]
    %172 = vmatpush.msra.mxu0 %v88
    %173 = vmatpush.msra.mxu0 %v84
    %174 = vmatpush.msra.mxu0 %v80
    %175 = vmatpush.msra.mxu0 %v76
    %176 = vmatpush.msra.mxu0 %v72
    %177 = vmatpush.msra.mxu0 %v68
    %178 = vmatpush.msra.mxu0 %v64
    %179 = vmatpush.msra.mxu0 %v60
    %180 = vmatpush.msra.mxu0 %v56
    %181 = vmatpush.msra.mxu0 %v52
    %182 = vmatpush.msra.mxu0 %v48
    %183 = vmatpush.msra.mxu0 %v44
    %184 = vmatpush.msra.mxu0 %v40
    %185 = vmatpush.msra.mxu0 %v36
    %186 = vmatpush.msra.mxu0 %v32
    %187 = vmatpush.msra.mxu0 %v28
    %188 = vmatmul.f32.gmra.mxu0 %v168
    %v189 = vpop.f32.mrf.mxu0
    %v190 = vadd.f32 %v158, %v189
    %191 = vdwg.mxu0
    %192 = vmatpush.msra.mxu0 %v152
    %193 = vmatpush.msra.mxu0 %v148
    %194 = vmatpush.msra.mxu0 %v144
    %195 = vmatpush.msra.mxu0 %v140
    %196 = vmatpush.msra.mxu0 %v136
    %197 = vmatpush.msra.mxu0 %v132
    %198 = vmatpush.msra.mxu0 %v128
    %199 = vmatpush.msra.mxu0 %v124
    %200 = vmatpush.msra.mxu0 %v120
    %201 = vmatpush.msra.mxu0 %v116
    %202 = vmatpush.msra.mxu0 %v112
    %203 = vmatpush.msra.mxu0 %v108
    %204 = vmatpush.msra.mxu0 %v104
    %205 = vmatpush.msra.mxu0 %v100
    %206 = vmatpush.msra.mxu0 %v96
    %207 = vmatpush.msra.mxu0 %v92
    %208 = vmatmul.f32.gmra.mxu0 %v169
    %v209 = vpop.f32.mrf.mxu0
    %v210 = vadd.f32 %v190, %v209
    %211 = vdwg.mxu0
    %212 = vmatpush.msra.mxu0 %v89
    %213 = vmatpush.msra.mxu0 %v85
    %214 = vmatpush.msra.mxu0 %v81
    %215 = vmatpush.msra.mxu0 %v77
    %216 = vmatpush.msra.mxu0 %v73
    %217 = vmatpush.msra.mxu0 %v69
    %218 = vmatpush.msra.mxu0 %v65
    %219 = vmatpush.msra.mxu0 %v61
    %220 = vmatpush.msra.mxu0 %v57
    %221 = vmatpush.msra.mxu0 %v53
    %222 = vmatpush.msra.mxu0 %v49
    %223 = vmatpush.msra.mxu0 %v45
    %224 = vmatpush.msra.mxu0 %v41
    %225 = vmatpush.msra.mxu0 %v37
    %226 = vmatpush.msra.mxu0 %v33
    %227 = vmatpush.msra.mxu0 %v29
    %228 = vmatmul.f32.gmra.mxu0 %v168
    %v229 = vpop.f32.mrf.mxu0
    %v230 = vadd.f32 %v159, %v229
    %231 = vdwg.mxu0
    %232 = vmatpush.msra.mxu0 %v153
    %233 = vmatpush.msra.mxu0 %v149
    %234 = vmatpush.msra.mxu0 %v145
    %235 = vmatpush.msra.mxu0 %v141
    %236 = vmatpush.msra.mxu0 %v137
    %237 = vmatpush.msra.mxu0 %v133
    %238 = vmatpush.msra.mxu0 %v129
    %239 = vmatpush.msra.mxu0 %v125
    %240 = vmatpush.msra.mxu0 %v121
    %241 = vmatpush.msra.mxu0 %v117
    %242 = vmatpush.msra.mxu0 %v113
    %243 = vmatpush.msra.mxu0 %v109
    %244 = vmatpush.msra.mxu0 %v105
    %245 = vmatpush.msra.mxu0 %v101
    %246 = vmatpush.msra.mxu0 %v97
    %247 = vmatpush.msra.mxu0 %v93
    %248 = vmatmul.f32.gmra.mxu0 %v169
    %v249 = vpop.f32.mrf.mxu0
    %v250 = vadd.f32 %v230, %v249
    %251 = vdwg.mxu0
    %252 = vmatpush.msra.mxu0 %v90
    %253 = vmatpush.msra.mxu0 %v86
    %254 = vmatpush.msra.mxu0 %v82
    %255 = vmatpush.msra.mxu0 %v78
    %256 = vmatpush.msra.mxu0 %v74
    %257 = vmatpush.msra.mxu0 %v70
    %258 = vmatpush.msra.mxu0 %v66
    %259 = vmatpush.msra.mxu0 %v62
    %260 = vmatpush.msra.mxu0 %v58
    %261 = vmatpush.msra.mxu0 %v54
    %262 = vmatpush.msra.mxu0 %v50
    %263 = vmatpush.msra.mxu0 %v46
    %264 = vmatpush.msra.mxu0 %v42
    %265 = vmatpush.msra.mxu0 %v38
    %266 = vmatpush.msra.mxu0 %v34
    %267 = vmatpush.msra.mxu0 %v30
    %268 = vmatmul.f32.gmra.mxu0 %v168
    %v269 = vpop.f32.mrf.mxu0
    %v270 = vadd.f32 %v160, %v269
    %271 = vdwg.mxu0
    %272 = vmatpush.msra.mxu0 %v154
    %273 = vmatpush.msra.mxu0 %v150
    %274 = vmatpush.msra.mxu0 %v146
    %275 = vmatpush.msra.mxu0 %v142
    %276 = vmatpush.msra.mxu0 %v138
    %277 = vmatpush.msra.mxu0 %v134
    %278 = vmatpush.msra.mxu0 %v130
    %279 = vmatpush.msra.mxu0 %v126
    %280 = vmatpush.msra.mxu0 %v122
    %281 = vmatpush.msra.mxu0 %v118
    %282 = vmatpush.msra.mxu0 %v114
    %283 = vmatpush.msra.mxu0 %v110
    %284 = vmatpush.msra.mxu0 %v106
    %285 = vmatpush.msra.mxu0 %v102
    %286 = vmatpush.msra.mxu0 %v98
    %287 = vmatpush.msra.mxu0 %v94
    %288 = vmatmul.f32.gmra.mxu0 %v169
    %v289 = vpop.f32.mrf.mxu0
    %v290 = vadd.f32 %v270, %v289
    %291 = vdwg.mxu0
    %292 = vmatpush.msra.mxu0 %v91
    %293 = vmatpush.msra.mxu0 %v87
    %294 = vmatpush.msra.mxu0 %v83
    %295 = vmatpush.msra.mxu0 %v79
    %296 = vmatpush.msra.mxu0 %v75
    %297 = vmatpush.msra.mxu0 %v71
    %298 = vmatpush.msra.mxu0 %v67
    %299 = vmatpush.msra.mxu0 %v63
    %300 = vmatpush.msra.mxu0 %v59
    %301 = vmatpush.msra.mxu0 %v55
    %302 = vmatpush.msra.mxu0 %v51
    %303 = vmatpush.msra.mxu0 %v47
    %304 = vmatpush.msra.mxu0 %v43
    %305 = vmatpush.msra.mxu0 %v39
    %306 = vmatpush.msra.mxu0 %v35
    %307 = vmatpush.msra.mxu0 %v31
    %308 = vmatmul.f32.gmra.mxu0 %v168
    %v309 = vpop.f32.mrf.mxu0
    %v310 = vadd.f32 %v161, %v309
    %311 = vdwg.mxu0
    %312 = vmatpush.msra.mxu0 %v155
    %313 = vmatpush.msra.mxu0 %v151
    %314 = vmatpush.msra.mxu0 %v147
    %315 = vmatpush.msra.mxu0 %v143
    %316 = vmatpush.msra.mxu0 %v139
    %317 = vmatpush.msra.mxu0 %v135
    %318 = vmatpush.msra.mxu0 %v131
    %319 = vmatpush.msra.mxu0 %v127
    %320 = vmatpush.msra.mxu0 %v123
    %321 = vmatpush.msra.mxu0 %v119
    %322 = vmatpush.msra.mxu0 %v115
    %323 = vmatpush.msra.mxu0 %v111
    %324 = vmatpush.msra.mxu0 %v107
    %325 = vmatpush.msra.mxu0 %v103
    %326 = vmatpush.msra.mxu0 %v99
    %327 = vmatpush.msra.mxu0 %v95
    %328 = vmatmul.f32.gmra.mxu0 %v169
    %v329 = vpop.f32.mrf.mxu0
    %v330 = vadd.f32 %v310, %v329
    %331 = vdwg.mxu0
    %v332 = vmax.f32 %v210, 0.0
    %v333 = vmax.f32 %v250, 0.0
    %v334 = vmax.f32 %v290, 0.0
    %v335 = vmax.f32 %v330, 0.0
    %v336 = vld [vmem:[%s3] sm:$0xff]
    %v337 = vld [vmem:[%s3 + $0x8] sm:$0xff]
    %v338 = vld [vmem:[%s3 + $0x10] sm:$0xff]
    %v339 = vld [vmem:[%s3 + $0x18] sm:$0xff]
    %v340 = vld [vmem:[%s3 + $0x20] sm:$0xff]
    %v341 = vld [vmem:[%s3 + $0x28] sm:$0xff]
    %v342 = vld [vmem:[%s3 + $0x30] sm:$0xff]
    %v343 = vld [vmem:[%s3 + $0x38] sm:$0xff]
    %v344 = vld [vmem:[%s3 + $0x40] sm:$0xff]
    %v345 = vld [vmem:[%s3 + $0x48] sm:$0xff]
    %v346 = vld [vmem:[%s3 + $0x50] sm:$0xff]
    %v347 = vld [vmem:[%s3 + $0x58] sm:$0xff]
    %v348 = vld [vmem:[%s3 + $0x60] sm:$0xff]
    %v349 = vld [vmem:[%s3 + $0x68] sm:$0xff]
    %v350 = vld [vmem:[%s3 + $0x70] sm:$0xff]
    %v351 = vld [vmem:[%s3 + $0x78] sm:$0xff]
    %v352 = vld [vmem:[%s3 + $0x80] sm:$0xff]
    %v353 = vld [vmem:[%s3 + $0x88] sm:$0xff]
    %v354 = vld [vmem:[%s3 + $0x90] sm:$0xff]
    %v355 = vld [vmem:[%s3 + $0x98] sm:$0xff]
    %v356 = vld [vmem:[%s3 + $0xa0] sm:$0xff]
    %v357 = vld [vmem:[%s3 + $0xa8] sm:$0xff]
    %v358 = vld [vmem:[%s3 + $0xb0] sm:$0xff]
    %v359 = vld [vmem:[%s3 + $0xb8] sm:$0xff]
    %v360 = vld [vmem:[%s3 + $0xc0] sm:$0xff]
    %v361 = vld [vmem:[%s3 + $0xc8] sm:$0xff]
    %v362 = vld [vmem:[%s3 + $0xd0] sm:$0xff]
    %v363 = vld [vmem:[%s3 + $0xd8] sm:$0xff]
    %v364 = vld [vmem:[%s3 + $0xe0] sm:$0xff]
    %v365 = vld [vmem:[%s3 + $0xe8] sm:$0xff]
    %v366 = vld [vmem:[%s3 + $0xf0] sm:$0xff]
    %v367 = vld [vmem:[%s3 + $0xf8] sm:$0xff]
    %v368 = vld [vmem:[%s3 + $0x100] sm:$0xff]
    %v369 = vld [vmem:[%s3 + $0x108] sm:$0xff]
    %v370 = vld [vmem:[%s3 + $0x110] sm:$0xff]
    %v371 = vld [vmem:[%s3 + $0x118] sm:$0xff]
    %v372 = vld [vmem:[%s3 + $0x120] sm:$0xff]
    %v373 = vld [vmem:[%s3 + $0x128] sm:$0xff]
    %v374 = vld [vmem:[%s3 + $0x130] sm:$0xff]
    %v375 = vld [vmem:[%s3 + $0x138] sm:$0xff]
    %v376 = vld [vmem:[%s3 + $0x140] sm:$0xff]
    %v377 = vld [vmem:[%s3 + $0x148] sm:$0xff]
    %v378 = vld [vmem:[%s3 + $0x150] sm:$0xff]
    %v379 = vld [vmem:[%s3 + $0x158] sm:$0xff]
    %v380 = vld [vmem:[%s3 + $0x160] sm:$0xff]
    %v381 = vld [vmem:[%s3 + $0x168] sm:$0xff]
    %v382 = vld [vmem:[%s3 + $0x170] sm:$0xff]
    %v383 = vld [vmem:[%s3 + $0x178] sm:$0xff]
    %v384 = vld [vmem:[%s3 + $0x180] sm:$0xff]
    %v385 = vld [vmem:[%s3 + $0x188] sm:$0xff]
    %v386 = vld [vmem:[%s3 + $0x190] sm:$0xff]
    %v387 = vld [vmem:[%s3 + $0x198] sm:$0xff]
    %v388 = vld [vmem:[%s3 + $0x1a0] sm:$0xff]
    %v389 = vld [vmem:[%s3 + $0x1a8] sm:$0xff]
    %v390 = vld [vmem:[%s3 + $0x1b0] sm:$0xff]
    %v391 = vld [vmem:[%s3 + $0x1b8] sm:$0xff]
    %v392 = vld [vmem:[%s3 + $0x1c0] sm:$0xff]
    %v393 = vld [vmem:[%s3 + $0x1c8] sm:$0xff]
    %v394 = vld [vmem:[%s3 + $0x1d0] sm:$0xff]
    %v395 = vld [vmem:[%s3 + $0x1d8] sm:$0xff]
    %v396 = vld [vmem:[%s3 + $0x1e0] sm:$0xff]
    %v397 = vld [vmem:[%s3 + $0x1e8] sm:$0xff]
    %v398 = vld [vmem:[%s3 + $0x1f0] sm:$0xff]
    %v399 = vld [vmem:[%s3 + $0x1f8] sm:$0xff]
    %v400 = vld [vmem:[%s3 + $0x200] sm:$0xff]
    %v401 = vld [vmem:[%s3 + $0x208] sm:$0xff]
    %v402 = vld [vmem:[%s3 + $0x210] sm:$0xff]
    %v403 = vld [vmem:[%s3 + $0x218] sm:$0xff]
    %v404 = vld [vmem:[%s3 + $0x220] sm:$0xff]
    %v405 = vld [vmem:[%s3 + $0x228] sm:$0xff]
    %v406 = vld [vmem:[%s3 + $0x230] sm:$0xff]
    %v407 = vld [vmem:[%s3 + $0x238] sm:$0xff]
    %v408 = vld [vmem:[%s3 + $0x240] sm:$0xff]
    %v409 = vld [vmem:[%s3 + $0x248] sm:$0xff]
    %v410 = vld [vmem:[%s3 + $0x250] sm:$0xff]
    %v411 = vld [vmem:[%s3 + $0x258] sm:$0xff]
    %v412 = vld [vmem:[%s3 + $0x260] sm:$0xff]
    %v413 = vld [vmem:[%s3 + $0x268] sm:$0xff]
    %v414 = vld [vmem:[%s3 + $0x270] sm:$0xff]
    %v415 = vld [vmem:[%s3 + $0x278] sm:$0xff]
    %v416 = vld [vmem:[%s3 + $0x280] sm:$0xff]
    %v417 = vld [vmem:[%s3 + $0x288] sm:$0xff]
    %v418 = vld [vmem:[%s3 + $0x290] sm:$0xff]
    %v419 = vld [vmem:[%s3 + $0x298] sm:$0xff]
    %v420 = vld [vmem:[%s3 + $0x2a0] sm:$0xff]
    %v421 = vld [vmem:[%s3 + $0x2a8] sm:$0xff]
    %v422 = vld [vmem:[%s3 + $0x2b0] sm:$0xff]
    %v423 = vld [vmem:[%s3 + $0x2b8] sm:$0xff]
    %v424 = vld [vmem:[%s3 + $0x2c0] sm:$0xff]
    %v425 = vld [vmem:[%s3 + $0x2c8] sm:$0xff]
    %v426 = vld [vmem:[%s3 + $0x2d0] sm:$0xff]
    %v427 = vld [vmem:[%s3 + $0x2d8] sm:$0xff]
    %v428 = vld [vmem:[%s3 + $0x2e0] sm:$0xff]
    %v429 = vld [vmem:[%s3 + $0x2e8] sm:$0xff]
    %v430 = vld [vmem:[%s3 + $0x2f0] sm:$0xff]
    %v431 = vld [vmem:[%s3 + $0x2f8] sm:$0xff]
    %v432 = vld [vmem:[%s3 + $0x300] sm:$0xff]
    %v433 = vld [vmem:[%s3 + $0x308] sm:$0xff]
    %v434 = vld [vmem:[%s3 + $0x310] sm:$0xff]
    %v435 = vld [vmem:[%s3 + $0x318] sm:$0xff]
    %v436 = vld [vmem:[%s3 + $0x320] sm:$0xff]
    %v437 = vld [vmem:[%s3 + $0x328] sm:$0xff]
    %v438 = vld [vmem:[%s3 + $0x330] sm:$0xff]
    %v439 = vld [vmem:[%s3 + $0x338] sm:$0xff]
    %v440 = vld [vmem:[%s3 + $0x340] sm:$0xff]
    %v441 = vld [vmem:[%s3 + $0x348] sm:$0xff]
    %v442 = vld [vmem:[%s3 + $0x350] sm:$0xff]
    %v443 = vld [vmem:[%s3 + $0x358] sm:$0xff]
    %v444 = vld [vmem:[%s3 + $0x360] sm:$0xff]
    %v445 = vld [vmem:[%s3 + $0x368] sm:$0xff]
    %v446 = vld [vmem:[%s3 + $0x370] sm:$0xff]
    %v447 = vld [vmem:[%s3 + $0x378] sm:$0xff]
    %v448 = vld [vmem:[%s3 + $0x380] sm:$0xff]
    %v449 = vld [vmem:[%s3 + $0x388] sm:$0xff]
    %v450 = vld [vmem:[%s3 + $0x390] sm:$0xff]
    %v451 = vld [vmem:[%s3 + $0x398] sm:$0xff]
    %v452 = vld [vmem:[%s3 + $0x3a0] sm:$0xff]
    %v453 = vld [vmem:[%s3 + $0x3a8] sm:$0xff]
    %v454 = vld [vmem:[%s3 + $0x3b0] sm:$0xff]
    %v455 = vld [vmem:[%s3 + $0x3b8] sm:$0xff]
    %v456 = vld [vmem:[%s3 + $0x3c0] sm:$0xff]
    %v457 = vld [vmem:[%s3 + $0x3c8] sm:$0xff]
    %v458 = vld [vmem:[%s3 + $0x3d0] sm:$0xff]
    %v459 = vld [vmem:[%s3 + $0x3d8] sm:$0xff]
    %v460 = vld [vmem:[%s3 + $0x3e0] sm:$0xff]
    %v461 = vld [vmem:[%s3 + $0x3e8] sm:$0xff]
    %v462 = vld [vmem:[%s3 + $0x3f0] sm:$0xff]
    %v463 = vld [vmem:[%s3 + $0x3f8] sm:$0xff]
    %v464 = vld [vmem:[%s3 + $0x400] sm:$0xff]
    %v465 = vld [vmem:[%s3 + $0x408] sm:$0xff]
    %v466 = vld [vmem:[%s3 + $0x410] sm:$0xff]
    %v467 = vld [vmem:[%s3 + $0x418] sm:$0xff]
    %v468 = vld [vmem:[%s3 + $0x420] sm:$0xff]
    %v469 = vld [vmem:[%s3 + $0x428] sm:$0xff]
    %v470 = vld [vmem:[%s3 + $0x430] sm:$0xff]
    %v471 = vld [vmem:[%s3 + $0x438] sm:$0xff]
    %v472 = vld [vmem:[%s3 + $0x440] sm:$0xff]
    %v473 = vld [vmem:[%s3 + $0x448] sm:$0xff]
    %v474 = vld [vmem:[%s3 + $0x450] sm:$0xff]
    %v475 = vld [vmem:[%s3 + $0x458] sm:$0xff]
    %v476 = vld [vmem:[%s3 + $0x460] sm:$0xff]
    %v477 = vld [vmem:[%s3 + $0x468] sm:$0xff]
    %v478 = vld [vmem:[%s3 + $0x470] sm:$0xff]
    %v479 = vld [vmem:[%s3 + $0x478] sm:$0xff]
    %v480 = vld [vmem:[%s3 + $0x480] sm:$0xff]
    %v481 = vld [vmem:[%s3 + $0x488] sm:$0xff]
    %v482 = vld [vmem:[%s3 + $0x490] sm:$0xff]
    %v483 = vld [vmem:[%s3 + $0x498] sm:$0xff]
    %v484 = vld [vmem:[%s3 + $0x4a0] sm:$0xff]
    %v485 = vld [vmem:[%s3 + $0x4a8] sm:$0xff]
    %v486 = vld [vmem:[%s3 + $0x4b0] sm:$0xff]
    %v487 = vld [vmem:[%s3 + $0x4b8] sm:$0xff]
    %v488 = vld [vmem:[%s3 + $0x4c0] sm:$0xff]
    %v489 = vld [vmem:[%s3 + $0x4c8] sm:$0xff]
    %v490 = vld [vmem:[%s3 + $0x4d0] sm:$0xff]
    %v491 = vld [vmem:[%s3 + $0x4d8] sm:$0xff]
    %v492 = vld [vmem:[%s3 + $0x4e0] sm:$0xff]
    %v493 = vld [vmem:[%s3 + $0x4e8] sm:$0xff]
    %v494 = vld [vmem:[%s3 + $0x4f0] sm:$0xff]
    %v495 = vld [vmem:[%s3 + $0x4f8] sm:$0xff]
    %v496 = vld [vmem:[%s3 + $0x500] sm:$0xff]
    %v497 = vld [vmem:[%s3 + $0x508] sm:$0xff]
    %v498 = vld [vmem:[%s3 + $0x510] sm:$0xff]
    %v499 = vld [vmem:[%s3 + $0x518] sm:$0xff]
    %v500 = vld [vmem:[%s3 + $0x520] sm:$0xff]
    %v501 = vld [vmem:[%s3 + $0x528] sm:$0xff]
    %v502 = vld [vmem:[%s3 + $0x530] sm:$0xff]
    %v503 = vld [vmem:[%s3 + $0x538] sm:$0xff]
    %v504 = vld [vmem:[%s3 + $0x540] sm:$0xff]
    %v505 = vld [vmem:[%s3 + $0x548] sm:$0xff]
    %v506 = vld [vmem:[%s3 + $0x550] sm:$0xff]
    %v507 = vld [vmem:[%s3 + $0x558] sm:$0xff]
    %v508 = vld [vmem:[%s3 + $0x560] sm:$0xff]
    %v509 = vld [vmem:[%s3 + $0x568] sm:$0xff]
    %v510 = vld [vmem:[%s3 + $0x570] sm:$0xff]
    %v511 = vld [vmem:[%s3 + $0x578] sm:$0xff]
    %v512 = vld [vmem:[%s3 + $0x580] sm:$0xff]
    %v513 = vld [vmem:[%s3 + $0x588] sm:$0xff]
    %v514 = vld [vmem:[%s3 + $0x590] sm:$0xff]
    %v515 = vld [vmem:[%s3 + $0x598] sm:$0xff]
    %v516 = vld [vmem:[%s3 + $0x5a0] sm:$0xff]
    %v517 = vld [vmem:[%s3 + $0x5a8] sm:$0xff]
    %v518 = vld [vmem:[%s3 + $0x5b0] sm:$0xff]
    %v519 = vld [vmem:[%s3 + $0x5b8] sm:$0xff]
    %v520 = vld [vmem:[%s3 + $0x5c0] sm:$0xff]
    %v521 = vld [vmem:[%s3 + $0x5c8] sm:$0xff]
    %v522 = vld [vmem:[%s3 + $0x5d0] sm:$0xff]
    %v523 = vld [vmem:[%s3 + $0x5d8] sm:$0xff]
    %v524 = vld [vmem:[%s3 + $0x5e0] sm:$0xff]
    %v525 = vld [vmem:[%s3 + $0x5e8] sm:$0xff]
    %v526 = vld [vmem:[%s3 + $0x5f0] sm:$0xff]
    %v527 = vld [vmem:[%s3 + $0x5f8] sm:$0xff]
    %v528 = vld [vmem:[%s3 + $0x600] sm:$0xff]
    %v529 = vld [vmem:[%s3 + $0x608] sm:$0xff]
    %v530 = vld [vmem:[%s3 + $0x610] sm:$0xff]
    %v531 = vld [vmem:[%s3 + $0x618] sm:$0xff]
    %v532 = vld [vmem:[%s3 + $0x620] sm:$0xff]
    %v533 = vld [vmem:[%s3 + $0x628] sm:$0xff]
    %v534 = vld [vmem:[%s3 + $0x630] sm:$0xff]
    %v535 = vld [vmem:[%s3 + $0x638] sm:$0xff]
    %v536 = vld [vmem:[%s3 + $0x640] sm:$0xff]
    %v537 = vld [vmem:[%s3 + $0x648] sm:$0xff]
    %v538 = vld [vmem:[%s3 + $0x650] sm:$0xff]
    %v539 = vld [vmem:[%s3 + $0x658] sm:$0xff]
    %v540 = vld [vmem:[%s3 + $0x660] sm:$0xff]
    %v541 = vld [vmem:[%s3 + $0x668] sm:$0xff]
    %v542 = vld [vmem:[%s3 + $0x670] sm:$0xff]
    %v543 = vld [vmem:[%s3 + $0x678] sm:$0xff]
    %v544 = vld [vmem:[%s3 + $0x680] sm:$0xff]
    %v545 = vld [vmem:[%s3 + $0x688] sm:$0xff]
    %v546 = vld [vmem:[%s3 + $0x690] sm:$0xff]
    %v547 = vld [vmem:[%s3 + $0x698] sm:$0xff]
    %v548 = vld [vmem:[%s3 + $0x6a0] sm:$0xff]
    %v549 = vld [vmem:[%s3 + $0x6a8] sm:$0xff]
    %v550 = vld [vmem:[%s3 + $0x6b0] sm:$0xff]
    %v551 = vld [vmem:[%s3 + $0x6b8] sm:$0xff]
    %v552 = vld [vmem:[%s3 + $0x6c0] sm:$0xff]
    %v553 = vld [vmem:[%s3 + $0x6c8] sm:$0xff]
    %v554 = vld [vmem:[%s3 + $0x6d0] sm:$0xff]
    %v555 = vld [vmem:[%s3 + $0x6d8] sm:$0xff]
    %v556 = vld [vmem:[%s3 + $0x6e0] sm:$0xff]
    %v557 = vld [vmem:[%s3 + $0x6e8] sm:$0xff]
    %v558 = vld [vmem:[%s3 + $0x6f0] sm:$0xff]
    %v559 = vld [vmem:[%s3 + $0x6f8] sm:$0xff]
    %v560 = vld [vmem:[%s3 + $0x700] sm:$0xff]
    %v561 = vld [vmem:[%s3 + $0x708] sm:$0xff]
    %v562 = vld [vmem:[%s3 + $0x710] sm:$0xff]
    %v563 = vld [vmem:[%s3 + $0x718] sm:$0xff]
    %v564 = vld [vmem:[%s3 + $0x720] sm:$0xff]
    %v565 = vld [vmem:[%s3 + $0x728] sm:$0xff]
    %v566 = vld [vmem:[%s3 + $0x730] sm:$0xff]
    %v567 = vld [vmem:[%s3 + $0x738] sm:$0xff]
    %v568 = vld [vmem:[%s3 + $0x740] sm:$0xff]
    %v569 = vld [vmem:[%s3 + $0x748] sm:$0xff]
    %v570 = vld [vmem:[%s3 + $0x750] sm:$0xff]
    %v571 = vld [vmem:[%s3 + $0x758] sm:$0xff]
    %v572 = vld [vmem:[%s3 + $0x760] sm:$0xff]
    %v573 = vld [vmem:[%s3 + $0x768] sm:$0xff]
    %v574 = vld [vmem:[%s3 + $0x770] sm:$0xff]
    %v575 = vld [vmem:[%s3 + $0x778] sm:$0xff]
    %v576 = vld [vmem:[%s3 + $0x780] sm:$0xff]
    %v577 = vld [vmem:[%s3 + $0x788] sm:$0xff]
    %v578 = vld [vmem:[%s3 + $0x790] sm:$0xff]
    %v579 = vld [vmem:[%s3 + $0x798] sm:$0xff]
    %v580 = vld [vmem:[%s3 + $0x7a0] sm:$0xff]
    %v581 = vld [vmem:[%s3 + $0x7a8] sm:$0xff]
    %v582 = vld [vmem:[%s3 + $0x7b0] sm:$0xff]
    %v583 = vld [vmem:[%s3 + $0x7b8] sm:$0xff]
    %v584 = vld [vmem:[%s3 + $0x7c0] sm:$0xff]
    %v585 = vld [vmem:[%s3 + $0x7c8] sm:$0xff]
    %v586 = vld [vmem:[%s3 + $0x7d0] sm:$0xff]
    %v587 = vld [vmem:[%s3 + $0x7d8] sm:$0xff]
    %v588 = vld [vmem:[%s3 + $0x7e0] sm:$0xff]
    %v589 = vld [vmem:[%s3 + $0x7e8] sm:$0xff]
    %v590 = vld [vmem:[%s3 + $0x7f0] sm:$0xff]
    %v591 = vld [vmem:[%s3 + $0x7f8] sm:$0xff]
    %v592 = vld [vmem:[%s3 + $0x800] sm:$0xff]
    %v593 = vld [vmem:[%s3 + $0x808] sm:$0xff]
    %v594 = vld [vmem:[%s3 + $0x810] sm:$0xff]
    %v595 = vld [vmem:[%s3 + $0x818] sm:$0xff]
    %v596 = vld [vmem:[%s3 + $0x820] sm:$0xff]
    %v597 = vld [vmem:[%s3 + $0x828] sm:$0xff]
    %v598 = vld [vmem:[%s3 + $0x830] sm:$0xff]
    %v599 = vld [vmem:[%s3 + $0x838] sm:$0xff]
    %v600 = vld [vmem:[%s3 + $0x840] sm:$0xff]
    %v601 = vld [vmem:[%s3 + $0x848] sm:$0xff]
    %v602 = vld [vmem:[%s3 + $0x850] sm:$0xff]
    %v603 = vld [vmem:[%s3 + $0x858] sm:$0xff]
    %v604 = vld [vmem:[%s3 + $0x860] sm:$0xff]
    %v605 = vld [vmem:[%s3 + $0x868] sm:$0xff]
    %v606 = vld [vmem:[%s3 + $0x870] sm:$0xff]
    %v607 = vld [vmem:[%s3 + $0x878] sm:$0xff]
    %v608 = vld [vmem:[%s3 + $0x880] sm:$0xff]
    %v609 = vld [vmem:[%s3 + $0x888] sm:$0xff]
    %v610 = vld [vmem:[%s3 + $0x890] sm:$0xff]
    %v611 = vld [vmem:[%s3 + $0x898] sm:$0xff]
    %v612 = vld [vmem:[%s3 + $0x8a0] sm:$0xff]
    %v613 = vld [vmem:[%s3 + $0x8a8] sm:$0xff]
    %v614 = vld [vmem:[%s3 + $0x8b0] sm:$0xff]
    %v615 = vld [vmem:[%s3 + $0x8b8] sm:$0xff]
    %v616 = vld [vmem:[%s3 + $0x8c0] sm:$0xff]
    %v617 = vld [vmem:[%s3 + $0x8c8] sm:$0xff]
    %v618 = vld [vmem:[%s3 + $0x8d0] sm:$0xff]
    %v619 = vld [vmem:[%s3 + $0x8d8] sm:$0xff]
    %v620 = vld [vmem:[%s3 + $0x8e0] sm:$0xff]
    %v621 = vld [vmem:[%s3 + $0x8e8] sm:$0xff]
    %v622 = vld [vmem:[%s3 + $0x8f0] sm:$0xff]
    %v623 = vld [vmem:[%s3 + $0x8f8] sm:$0xff]
    %v624 = vld [vmem:[%s3 + $0x900] sm:$0xff]
    %v625 = vld [vmem:[%s3 + $0x908] sm:$0xff]
    %v626 = vld [vmem:[%s3 + $0x910] sm:$0xff]
    %v627 = vld [vmem:[%s3 + $0x918] sm:$0xff]
    %v628 = vld [vmem:[%s3 + $0x920] sm:$0xff]
    %v629 = vld [vmem:[%s3 + $0x928] sm:$0xff]
    %v630 = vld [vmem:[%s3 + $0x930] sm:$0xff]
    %v631 = vld [vmem:[%s3 + $0x938] sm:$0xff]
    %v632 = vld [vmem:[%s3 + $0x940] sm:$0xff]
    %v633 = vld [vmem:[%s3 + $0x948] sm:$0xff]
    %v634 = vld [vmem:[%s3 + $0x950] sm:$0xff]
    %v635 = vld [vmem:[%s3 + $0x958] sm:$0xff]
    %v636 = vld [vmem:[%s3 + $0x960] sm:$0xff]
    %v637 = vld [vmem:[%s3 + $0x968] sm:$0xff]
    %v638 = vld [vmem:[%s3 + $0x970] sm:$0xff]
    %v639 = vld [vmem:[%s3 + $0x978] sm:$0xff]
    %v640 = vld [vmem:[%s3 + $0x980] sm:$0xff]
    %v641 = vld [vmem:[%s3 + $0x988] sm:$0xff]
    %v642 = vld [vmem:[%s3 + $0x990] sm:$0xff]
    %v643 = vld [vmem:[%s3 + $0x998] sm:$0xff]
    %v644 = vld [vmem:[%s3 + $0x9a0] sm:$0xff]
    %v645 = vld [vmem:[%s3 + $0x9a8] sm:$0xff]
    %v646 = vld [vmem:[%s3 + $0x9b0] sm:$0xff]
    %v647 = vld [vmem:[%s3 + $0x9b8] sm:$0xff]
    %v648 = vld [vmem:[%s3 + $0x9c0] sm:$0xff]
    %v649 = vld [vmem:[%s3 + $0x9c8] sm:$0xff]
    %v650 = vld [vmem:[%s3 + $0x9d0] sm:$0xff]
    %v651 = vld [vmem:[%s3 + $0x9d8] sm:$0xff]
    %v652 = vld [vmem:[%s3 + $0x9e0] sm:$0xff]
    %v653 = vld [vmem:[%s3 + $0x9e8] sm:$0xff]
    %v654 = vld [vmem:[%s3 + $0x9f0] sm:$0xff]
    %v655 = vld [vmem:[%s3 + $0x9f8] sm:$0xff]
    %v656 = vld [vmem:[%s3 + $0xa00] sm:$0xff]
    %v657 = vld [vmem:[%s3 + $0xa08] sm:$0xff]
    %v658 = vld [vmem:[%s3 + $0xa10] sm:$0xff]
    %v659 = vld [vmem:[%s3 + $0xa18] sm:$0xff]
    %v660 = vld [vmem:[%s3 + $0xa20] sm:$0xff]
    %v661 = vld [vmem:[%s3 + $0xa28] sm:$0xff]
    %v662 = vld [vmem:[%s3 + $0xa30] sm:$0xff]
    %v663 = vld [vmem:[%s3 + $0xa38] sm:$0xff]
    %v664 = vld [vmem:[%s3 + $0xa40] sm:$0xff]
    %v665 = vld [vmem:[%s3 + $0xa48] sm:$0xff]
    %v666 = vld [vmem:[%s3 + $0xa50] sm:$0xff]
    %v667 = vld [vmem:[%s3 + $0xa58] sm:$0xff]
    %v668 = vld [vmem:[%s3 + $0xa60] sm:$0xff]
    %v669 = vld [vmem:[%s3 + $0xa68] sm:$0xff]
    %v670 = vld [vmem:[%s3 + $0xa70] sm:$0xff]
    %v671 = vld [vmem:[%s3 + $0xa78] sm:$0xff]
    %v672 = vld [vmem:[%s3 + $0xa80] sm:$0xff]
    %v673 = vld [vmem:[%s3 + $0xa88] sm:$0xff]
    %v674 = vld [vmem:[%s3 + $0xa90] sm:$0xff]
    %v675 = vld [vmem:[%s3 + $0xa98] sm:$0xff]
    %v676 = vld [vmem:[%s3 + $0xaa0] sm:$0xff]
    %v677 = vld [vmem:[%s3 + $0xaa8] sm:$0xff]
    %v678 = vld [vmem:[%s3 + $0xab0] sm:$0xff]
    %v679 = vld [vmem:[%s3 + $0xab8] sm:$0xff]
    %v680 = vld [vmem:[%s3 + $0xac0] sm:$0xff]
    %v681 = vld [vmem:[%s3 + $0xac8] sm:$0xff]
    %v682 = vld [vmem:[%s3 + $0xad0] sm:$0xff]
    %v683 = vld [vmem:[%s3 + $0xad8] sm:$0xff]
    %v684 = vld [vmem:[%s3 + $0xae0] sm:$0xff]
    %v685 = vld [vmem:[%s3 + $0xae8] sm:$0xff]
    %v686 = vld [vmem:[%s3 + $0xaf0] sm:$0xff]
    %v687 = vld [vmem:[%s3 + $0xaf8] sm:$0xff]
    %v688 = vld [vmem:[%s3 + $0xb00] sm:$0xff]
    %v689 = vld [vmem:[%s3 + $0xb08] sm:$0xff]
    %v690 = vld [vmem:[%s3 + $0xb10] sm:$0xff]
    %v691 = vld [vmem:[%s3 + $0xb18] sm:$0xff]
    %v692 = vld [vmem:[%s3 + $0xb20] sm:$0xff]
    %v693 = vld [vmem:[%s3 + $0xb28] sm:$0xff]
    %v694 = vld [vmem:[%s3 + $0xb30] sm:$0xff]
    %v695 = vld [vmem:[%s3 + $0xb38] sm:$0xff]
    %v696 = vld [vmem:[%s3 + $0xb40] sm:$0xff]
    %v697 = vld [vmem:[%s3 + $0xb48] sm:$0xff]
    %v698 = vld [vmem:[%s3 + $0xb50] sm:$0xff]
    %v699 = vld [vmem:[%s3 + $0xb58] sm:$0xff]
    %v700 = vld [vmem:[%s3 + $0xb60] sm:$0xff]
    %v701 = vld [vmem:[%s3 + $0xb68] sm:$0xff]
    %v702 = vld [vmem:[%s3 + $0xb70] sm:$0xff]
    %v703 = vld [vmem:[%s3 + $0xb78] sm:$0xff]
    %v704 = vld [vmem:[%s3 + $0xb80] sm:$0xff]
    %v705 = vld [vmem:[%s3 + $0xb88] sm:$0xff]
    %v706 = vld [vmem:[%s3 + $0xb90] sm:$0xff]
    %v707 = vld [vmem:[%s3 + $0xb98] sm:$0xff]
    %v708 = vld [vmem:[%s3 + $0xba0] sm:$0xff]
    %v709 = vld [vmem:[%s3 + $0xba8] sm:$0xff]
    %v710 = vld [vmem:[%s3 + $0xbb0] sm:$0xff]
    %v711 = vld [vmem:[%s3 + $0xbb8] sm:$0xff]
    %v712 = vld [vmem:[%s3 + $0xbc0] sm:$0xff]
    %v713 = vld [vmem:[%s3 + $0xbc8] sm:$0xff]
    %v714 = vld [vmem:[%s3 + $0xbd0] sm:$0xff]
    %v715 = vld [vmem:[%s3 + $0xbd8] sm:$0xff]
    %v716 = vld [vmem:[%s3 + $0xbe0] sm:$0xff]
    %v717 = vld [vmem:[%s3 + $0xbe8] sm:$0xff]
    %v718 = vld [vmem:[%s3 + $0xbf0] sm:$0xff]
    %v719 = vld [vmem:[%s3 + $0xbf8] sm:$0xff]
    %v720 = vld [vmem:[%s3 + $0xc00] sm:$0xff]
    %v721 = vld [vmem:[%s3 + $0xc08] sm:$0xff]
    %v722 = vld [vmem:[%s3 + $0xc10] sm:$0xff]
    %v723 = vld [vmem:[%s3 + $0xc18] sm:$0xff]
    %v724 = vld [vmem:[%s3 + $0xc20] sm:$0xff]
    %v725 = vld [vmem:[%s3 + $0xc28] sm:$0xff]
    %v726 = vld [vmem:[%s3 + $0xc30] sm:$0xff]
    %v727 = vld [vmem:[%s3 + $0xc38] sm:$0xff]
    %v728 = vld [vmem:[%s3 + $0xc40] sm:$0xff]
    %v729 = vld [vmem:[%s3 + $0xc48] sm:$0xff]
    %v730 = vld [vmem:[%s3 + $0xc50] sm:$0xff]
    %v731 = vld [vmem:[%s3 + $0xc58] sm:$0xff]
    %v732 = vld [vmem:[%s3 + $0xc60] sm:$0xff]
    %v733 = vld [vmem:[%s3 + $0xc68] sm:$0xff]
    %v734 = vld [vmem:[%s3 + $0xc70] sm:$0xff]
    %v735 = vld [vmem:[%s3 + $0xc78] sm:$0xff]
    %v736 = vld [vmem:[%s3 + $0xc80] sm:$0xff]
    %v737 = vld [vmem:[%s3 + $0xc88] sm:$0xff]
    %v738 = vld [vmem:[%s3 + $0xc90] sm:$0xff]
    %v739 = vld [vmem:[%s3 + $0xc98] sm:$0xff]
    %v740 = vld [vmem:[%s3 + $0xca0] sm:$0xff]
    %v741 = vld [vmem:[%s3 + $0xca8] sm:$0xff]
    %v742 = vld [vmem:[%s3 + $0xcb0] sm:$0xff]
    %v743 = vld [vmem:[%s3 + $0xcb8] sm:$0xff]
    %v744 = vld [vmem:[%s3 + $0xcc0] sm:$0xff]
    %v745 = vld [vmem:[%s3 + $0xcc8] sm:$0xff]
    %v746 = vld [vmem:[%s3 + $0xcd0] sm:$0xff]
    %v747 = vld [vmem:[%s3 + $0xcd8] sm:$0xff]
    %v748 = vld [vmem:[%s3 + $0xce0] sm:$0xff]
    %v749 = vld [vmem:[%s3 + $0xce8] sm:$0xff]
    %v750 = vld [vmem:[%s3 + $0xcf0] sm:$0xff]
    %v751 = vld [vmem:[%s3 + $0xcf8] sm:$0xff]
    %v752 = vld [vmem:[%s3 + $0xd00] sm:$0xff]
    %v753 = vld [vmem:[%s3 + $0xd08] sm:$0xff]
    %v754 = vld [vmem:[%s3 + $0xd10] sm:$0xff]
    %v755 = vld [vmem:[%s3 + $0xd18] sm:$0xff]
    %v756 = vld [vmem:[%s3 + $0xd20] sm:$0xff]
    %v757 = vld [vmem:[%s3 + $0xd28] sm:$0xff]
    %v758 = vld [vmem:[%s3 + $0xd30] sm:$0xff]
    %v759 = vld [vmem:[%s3 + $0xd38] sm:$0xff]
    %v760 = vld [vmem:[%s3 + $0xd40] sm:$0xff]
    %v761 = vld [vmem:[%s3 + $0xd48] sm:$0xff]
    %v762 = vld [vmem:[%s3 + $0xd50] sm:$0xff]
    %v763 = vld [vmem:[%s3 + $0xd58] sm:$0xff]
    %v764 = vld [vmem:[%s3 + $0xd60] sm:$0xff]
    %v765 = vld [vmem:[%s3 + $0xd68] sm:$0xff]
    %v766 = vld [vmem:[%s3 + $0xd70] sm:$0xff]
    %v767 = vld [vmem:[%s3 + $0xd78] sm:$0xff]
    %v768 = vld [vmem:[%s3 + $0xd80] sm:$0xff]
    %v769 = vld [vmem:[%s3 + $0xd88] sm:$0xff]
    %v770 = vld [vmem:[%s3 + $0xd90] sm:$0xff]
    %v771 = vld [vmem:[%s3 + $0xd98] sm:$0xff]
    %v772 = vld [vmem:[%s3 + $0xda0] sm:$0xff]
    %v773 = vld [vmem:[%s3 + $0xda8] sm:$0xff]
    %v774 = vld [vmem:[%s3 + $0xdb0] sm:$0xff]
    %v775 = vld [vmem:[%s3 + $0xdb8] sm:$0xff]
    %v776 = vld [vmem:[%s3 + $0xdc0] sm:$0xff]
    %v777 = vld [vmem:[%s3 + $0xdc8] sm:$0xff]
    %v778 = vld [vmem:[%s3 + $0xdd0] sm:$0xff]
    %v779 = vld [vmem:[%s3 + $0xdd8] sm:$0xff]
    %v780 = vld [vmem:[%s3 + $0xde0] sm:$0xff]
    %v781 = vld [vmem:[%s3 + $0xde8] sm:$0xff]
    %v782 = vld [vmem:[%s3 + $0xdf0] sm:$0xff]
    %v783 = vld [vmem:[%s3 + $0xdf8] sm:$0xff]
    %v784 = vld [vmem:[%s3 + $0xe00] sm:$0xff]
    %v785 = vld [vmem:[%s3 + $0xe08] sm:$0xff]
    %v786 = vld [vmem:[%s3 + $0xe10] sm:$0xff]
    %v787 = vld [vmem:[%s3 + $0xe18] sm:$0xff]
    %v788 = vld [vmem:[%s3 + $0xe20] sm:$0xff]
    %v789 = vld [vmem:[%s3 + $0xe28] sm:$0xff]
    %v790 = vld [vmem:[%s3 + $0xe30] sm:$0xff]
    %v791 = vld [vmem:[%s3 + $0xe38] sm:$0xff]
    %v792 = vld [vmem:[%s3 + $0xe40] sm:$0xff]
    %v793 = vld [vmem:[%s3 + $0xe48] sm:$0xff]
    %v794 = vld [vmem:[%s3 + $0xe50] sm:$0xff]
    %v795 = vld [vmem:[%s3 + $0xe58] sm:$0xff]
    %v796 = vld [vmem:[%s3 + $0xe60] sm:$0xff]
    %v797 = vld [vmem:[%s3 + $0xe68] sm:$0xff]
    %v798 = vld [vmem:[%s3 + $0xe70] sm:$0xff]
    %v799 = vld [vmem:[%s3 + $0xe78] sm:$0xff]
    %v800 = vld [vmem:[%s3 + $0xe80] sm:$0xff]
    %v801 = vld [vmem:[%s3 + $0xe88] sm:$0xff]
    %v802 = vld [vmem:[%s3 + $0xe90] sm:$0xff]
    %v803 = vld [vmem:[%s3 + $0xe98] sm:$0xff]
    %v804 = vld [vmem:[%s3 + $0xea0] sm:$0xff]
    %v805 = vld [vmem:[%s3 + $0xea8] sm:$0xff]
    %v806 = vld [vmem:[%s3 + $0xeb0] sm:$0xff]
    %v807 = vld [vmem:[%s3 + $0xeb8] sm:$0xff]
    %v808 = vld [vmem:[%s3 + $0xec0] sm:$0xff]
    %v809 = vld [vmem:[%s3 + $0xec8] sm:$0xff]
    %v810 = vld [vmem:[%s3 + $0xed0] sm:$0xff]
    %v811 = vld [vmem:[%s3 + $0xed8] sm:$0xff]
    %v812 = vld [vmem:[%s3 + $0xee0] sm:$0xff]
    %v813 = vld [vmem:[%s3 + $0xee8] sm:$0xff]
    %v814 = vld [vmem:[%s3 + $0xef0] sm:$0xff]
    %v815 = vld [vmem:[%s3 + $0xef8] sm:$0xff]
    %v816 = vld [vmem:[%s3 + $0xf00] sm:$0xff]
    %v817 = vld [vmem:[%s3 + $0xf08] sm:$0xff]
    %v818 = vld [vmem:[%s3 + $0xf10] sm:$0xff]
    %v819 = vld [vmem:[%s3 + $0xf18] sm:$0xff]
    %v820 = vld [vmem:[%s3 + $0xf20] sm:$0xff]
    %v821 = vld [vmem:[%s3 + $0xf28] sm:$0xff]
    %v822 = vld [vmem:[%s3 + $0xf30] sm:$0xff]
    %v823 = vld [vmem:[%s3 + $0xf38] sm:$0xff]
    %v824 = vld [vmem:[%s3 + $0xf40] sm:$0xff]
    %v825 = vld [vmem:[%s3 + $0xf48] sm:$0xff]
    %v826 = vld [vmem:[%s3 + $0xf50] sm:$0xff]
    %v827 = vld [vmem:[%s3 + $0xf58] sm:$0xff]
    %v828 = vld [vmem:[%s3 + $0xf60] sm:$0xff]
    %v829 = vld [vmem:[%s3 + $0xf68] sm:$0xff]
    %v830 = vld [vmem:[%s3 + $0xf70] sm:$0xff]
    %v831 = vld [vmem:[%s3 + $0xf78] sm:$0xff]
    %v832 = vld [vmem:[%s3 + $0xf80] sm:$0xff]
    %v833 = vld [vmem:[%s3 + $0xf88] sm:$0xff]
    %v834 = vld [vmem:[%s3 + $0xf90] sm:$0xff]
    %v835 = vld [vmem:[%s3 + $0xf98] sm:$0xff]
    %v836 = vld [vmem:[%s3 + $0xfa0] sm:$0xff]
    %v837 = vld [vmem:[%s3 + $0xfa8] sm:$0xff]
    %v838 = vld [vmem:[%s3 + $0xfb0] sm:$0xff]
    %v839 = vld [vmem:[%s3 + $0xfb8] sm:$0xff]
    %v840 = vld [vmem:[%s3 + $0xfc0] sm:$0xff]
    %v841 = vld [vmem:[%s3 + $0xfc8] sm:$0xff]
    %v842 = vld [vmem:[%s3 + $0xfd0] sm:$0xff]
    %v843 = vld [vmem:[%s3 + $0xfd8] sm:$0xff]
    %v844 = vld [vmem:[%s3 + $0xfe0] sm:$0xff]
    %v845 = vld [vmem:[%s3 + $0xfe8] sm:$0xff]
    %v846 = vld [vmem:[%s3 + $0xff0] sm:$0xff]
    %v847 = vld [vmem:[%s3 + $0xff8] sm:$0xff]
    %v848 = vld [vmem:[%s4] sm:$0xff]
    %v850 = vperm.slane %v848, 0
    %v851 = vperm.slane %v848, 1
    %v852 = vperm.slane %v848, 2
    %v853 = vperm.slane %v848, 3
    %v854 = vperm.slane %v848, 4
    %v855 = vperm.slane %v848, 5
    %v856 = vperm.slane %v848, 6
    %v857 = vperm.slane %v848, 7
    %866 = vmatpush.msra.mxu0 %v456
    %867 = vmatpush.msra.mxu0 %v448
    %868 = vmatpush.msra.mxu0 %v440
    %869 = vmatpush.msra.mxu0 %v432
    %870 = vmatpush.msra.mxu0 %v424
    %871 = vmatpush.msra.mxu0 %v416
    %872 = vmatpush.msra.mxu0 %v408
    %873 = vmatpush.msra.mxu0 %v400
    %874 = vmatpush.msra.mxu0 %v392
    %875 = vmatpush.msra.mxu0 %v384
    %876 = vmatpush.msra.mxu0 %v376
    %877 = vmatpush.msra.mxu0 %v368
    %878 = vmatpush.msra.mxu0 %v360
    %879 = vmatpush.msra.mxu0 %v352
    %880 = vmatpush.msra.mxu0 %v344
    %881 = vmatpush.msra.mxu0 %v336
    %882 = vmatmul.f32.gmra.mxu0 %v332
    %v883 = vpop.f32.mrf.mxu0
    %v884 = vadd.f32 %v850, %v883
    %885 = vdwg.mxu0
    %886 = vmatpush.msra.mxu0 %v584
    %887 = vmatpush.msra.mxu0 %v576
    %888 = vmatpush.msra.mxu0 %v568
    %889 = vmatpush.msra.mxu0 %v560
    %890 = vmatpush.msra.mxu0 %v552
    %891 = vmatpush.msra.mxu0 %v544
    %892 = vmatpush.msra.mxu0 %v536
    %893 = vmatpush.msra.mxu0 %v528
    %894 = vmatpush.msra.mxu0 %v520
    %895 = vmatpush.msra.mxu0 %v512
    %896 = vmatpush.msra.mxu0 %v504
    %897 = vmatpush.msra.mxu0 %v496
    %898 = vmatpush.msra.mxu0 %v488
    %899 = vmatpush.msra.mxu0 %v480
    %900 = vmatpush.msra.mxu0 %v472
    %901 = vmatpush.msra.mxu0 %v464
    %902 = vmatmul.f32.gmra.mxu0 %v333
    %v903 = vpop.f32.mrf.mxu0
    %v904 = vadd.f32 %v884, %v903
    %905 = vdwg.mxu0
    %906 = vmatpush.msra.mxu0 %v712
    %907 = vmatpush.msra.mxu0 %v704
    %908 = vmatpush.msra.mxu0 %v696
    %909 = vmatpush.msra.mxu0 %v688
    %910 = vmatpush.msra.mxu0 %v680
    %911 = vmatpush.msra.mxu0 %v672
    %912 = vmatpush.msra.mxu0 %v664
    %913 = vmatpush.msra.mxu0 %v656
    %914 = vmatpush.msra.mxu0 %v648
    %915 = vmatpush.msra.mxu0 %v640
    %916 = vmatpush.msra.mxu0 %v632
    %917 = vmatpush.msra.mxu0 %v624
    %918 = vmatpush.msra.mxu0 %v616
    %919 = vmatpush.msra.mxu0 %v608
    %920 = vmatpush.msra.mxu0 %v600
    %921 = vmatpush.msra.mxu0 %v592
    %922 = vmatmul.f32.gmra.mxu0 %v334
    %v923 = vpop.f32.mrf.mxu0
    %v924 = vadd.f32 %v904, %v923
    %925 = vdwg.mxu0
    %926 = vmatpush.msra.mxu0 %v840
    %927 = vmatpush.msra.mxu0 %v832
    %928 = vmatpush.msra.mxu0 %v824
    %929 = vmatpush.msra.mxu0 %v816
    %930 = vmatpush.msra.mxu0 %v808
    %931 = vmatpush.msra.mxu0 %v800
    %932 = vmatpush.msra.mxu0 %v792
    %933 = vmatpush.msra.mxu0 %v784
    %934 = vmatpush.msra.mxu0 %v776
    %935 = vmatpush.msra.mxu0 %v768
    %936 = vmatpush.msra.mxu0 %v760
    %937 = vmatpush.msra.mxu0 %v752
    %938 = vmatpush.msra.mxu0 %v744
    %939 = vmatpush.msra.mxu0 %v736
    %940 = vmatpush.msra.mxu0 %v728
    %941 = vmatpush.msra.mxu0 %v720
    %942 = vmatmul.f32.gmra.mxu0 %v335
    %v943 = vpop.f32.mrf.mxu0
    %v944 = vadd.f32 %v924, %v943
    %945 = vdwg.mxu0
    %946 = vmatpush.msra.mxu0 %v457
    %947 = vmatpush.msra.mxu0 %v449
    %948 = vmatpush.msra.mxu0 %v441
    %949 = vmatpush.msra.mxu0 %v433
    %950 = vmatpush.msra.mxu0 %v425
    %951 = vmatpush.msra.mxu0 %v417
    %952 = vmatpush.msra.mxu0 %v409
    %953 = vmatpush.msra.mxu0 %v401
    %954 = vmatpush.msra.mxu0 %v393
    %955 = vmatpush.msra.mxu0 %v385
    %956 = vmatpush.msra.mxu0 %v377
    %957 = vmatpush.msra.mxu0 %v369
    %958 = vmatpush.msra.mxu0 %v361
    %959 = vmatpush.msra.mxu0 %v353
    %960 = vmatpush.msra.mxu0 %v345
    %961 = vmatpush.msra.mxu0 %v337
    %962 = vmatmul.f32.gmra.mxu0 %v332
    %v963 = vpop.f32.mrf.mxu0
    %v964 = vadd.f32 %v851, %v963
    %965 = vdwg.mxu0
    %966 = vmatpush.msra.mxu0 %v585
    %967 = vmatpush.msra.mxu0 %v577
    %968 = vmatpush.msra.mxu0 %v569
    %969 = vmatpush.msra.mxu0 %v561
    %970 = vmatpush.msra.mxu0 %v553
    %971 = vmatpush.msra.mxu0 %v545
    %972 = vmatpush.msra.mxu0 %v537
    %973 = vmatpush.msra.mxu0 %v529
    %974 = vmatpush.msra.mxu0 %v521
    %975 = vmatpush.msra.mxu0 %v513
    %976 = vmatpush.msra.mxu0 %v505
    %977 = vmatpush.msra.mxu0 %v497
    %978 = vmatpush.msra.mxu0 %v489
    %979 = vmatpush.msra.mxu0 %v481
    %980 = vmatpush.msra.mxu0 %v473
    %981 = vmatpush.msra.mxu0 %v465
    %982 = vmatmul.f32.gmra.mxu0 %v333
    %v983 = vpop.f32.mrf.mxu0
    %v984 = vadd.f32 %v964, %v983
    %985 = vdwg.mxu0
    %986 = vmatpush.msra.mxu0 %v713
    %987 = vmatpush.msra.mxu0 %v705
    %988 = vmatpush.msra.mxu0 %v697
    %989 = vmatpush.msra.mxu0 %v689
    %990 = vmatpush.msra.mxu0 %v681
    %991 = vmatpush.msra.mxu0 %v673
    %992 = vmatpush.msra.mxu0 %v665
    %993 = vmatpush.msra.mxu0 %v657
    %994 = vmatpush.msra.mxu0 %v649
    %995 = vmatpush.msra.mxu0 %v641
    %996 = vmatpush.msra.mxu0 %v633
    %997 = vmatpush.msra.mxu0 %v625
    %998 = vmatpush.msra.mxu0 %v617
    %999 = vmatpush.msra.mxu0 %v609
    %1000 = vmatpush.msra.mxu0 %v601
    %1001 = vmatpush.msra.mxu0 %v593
    %1002 = vmatmul.f32.gmra.mxu0 %v334
    %v1003 = vpop.f32.mrf.mxu0
    %v1004 = vadd.f32 %v984, %v1003
    %1005 = vdwg.mxu0
    %1006 = vmatpush.msra.mxu0 %v841
    %1007 = vmatpush.msra.mxu0 %v833
    %1008 = vmatpush.msra.mxu0 %v825
    %1009 = vmatpush.msra.mxu0 %v817
    %1010 = vmatpush.msra.mxu0 %v809
    %1011 = vmatpush.msra.mxu0 %v801
    %1012 = vmatpush.msra.mxu0 %v793
    %1013 = vmatpush.msra.mxu0 %v785
    %1014 = vmatpush.msra.mxu0 %v777
    %1015 = vmatpush.msra.mxu0 %v769
    %1016 = vmatpush.msra.mxu0 %v761
    %1017 = vmatpush.msra.mxu0 %v753
    %1018 = vmatpush.msra.mxu0 %v745
    %1019 = vmatpush.msra.mxu0 %v737
    %1020 = vmatpush.msra.mxu0 %v729
    %1021 = vmatpush.msra.mxu0 %v721
    %1022 = vmatmul.f32.gmra.mxu0 %v335
    %v1023 = vpop.f32.mrf.mxu0
    %v1024 = vadd.f32 %v1004, %v1023
    %1025 = vdwg.mxu0
    %1026 = vmatpush.msra.mxu0 %v458
    %1027 = vmatpush.msra.mxu0 %v450
    %1028 = vmatpush.msra.mxu0 %v442
    %1029 = vmatpush.msra.mxu0 %v434
    %1030 = vmatpush.msra.mxu0 %v426
    %1031 = vmatpush.msra.mxu0 %v418
    %1032 = vmatpush.msra.mxu0 %v410
    %1033 = vmatpush.msra.mxu0 %v402
    %1034 = vmatpush.msra.mxu0 %v394
    %1035 = vmatpush.msra.mxu0 %v386
    %1036 = vmatpush.msra.mxu0 %v378
    %1037 = vmatpush.msra.mxu0 %v370
    %1038 = vmatpush.msra.mxu0 %v362
    %1039 = vmatpush.msra.mxu0 %v354
    %1040 = vmatpush.msra.mxu0 %v346
    %1041 = vmatpush.msra.mxu0 %v338
    %1042 = vmatmul.f32.gmra.mxu0 %v332
    %v1043 = vpop.f32.mrf.mxu0
    %v1044 = vadd.f32 %v852, %v1043
    %1045 = vdwg.mxu0
    %1046 = vmatpush.msra.mxu0 %v586
    %1047 = vmatpush.msra.mxu0 %v578
    %1048 = vmatpush.msra.mxu0 %v570
    %1049 = vmatpush.msra.mxu0 %v562
    %1050 = vmatpush.msra.mxu0 %v554
    %1051 = vmatpush.msra.mxu0 %v546
    %1052 = vmatpush.msra.mxu0 %v538
    %1053 = vmatpush.msra.mxu0 %v530
    %1054 = vmatpush.msra.mxu0 %v522
    %1055 = vmatpush.msra.mxu0 %v514
    %1056 = vmatpush.msra.mxu0 %v506
    %1057 = vmatpush.msra.mxu0 %v498
    %1058 = vmatpush.msra.mxu0 %v490
    %1059 = vmatpush.msra.mxu0 %v482
    %1060 = vmatpush.msra.mxu0 %v474
    %1061 = vmatpush.msra.mxu0 %v466
    %1062 = vmatmul.f32.gmra.mxu0 %v333
    %v1063 = vpop.f32.mrf.mxu0
    %v1064 = vadd.f32 %v1044, %v1063
    %1065 = vdwg.mxu0
    %1066 = vmatpush.msra.mxu0 %v714
    %1067 = vmatpush.msra.mxu0 %v706
    %1068 = vmatpush.msra.mxu0 %v698
    %1069 = vmatpush.msra.mxu0 %v690
    %1070 = vmatpush.msra.mxu0 %v682
    %1071 = vmatpush.msra.mxu0 %v674
    %1072 = vmatpush.msra.mxu0 %v666
    %1073 = vmatpush.msra.mxu0 %v658
    %1074 = vmatpush.msra.mxu0 %v650
    %1075 = vmatpush.msra.mxu0 %v642
    %1076 = vmatpush.msra.mxu0 %v634
    %1077 = vmatpush.msra.mxu0 %v626
    %1078 = vmatpush.msra.mxu0 %v618
    %1079 = vmatpush.msra.mxu0 %v610
    %1080 = vmatpush.msra.mxu0 %v602
    %1081 = vmatpush.msra.mxu0 %v594
    %1082 = vmatmul.f32.gmra.mxu0 %v334
    %v1083 = vpop.f32.mrf.mxu0
    %v1084 = vadd.f32 %v1064, %v1083
    %1085 = vdwg.mxu0
    %1086 = vmatpush.msra.mxu0 %v842
    %1087 = vmatpush.msra.mxu0 %v834
    %1088 = vmatpush.msra.mxu0 %v826
    %1089 = vmatpush.msra.mxu0 %v818
    %1090 = vmatpush.msra.mxu0 %v810
    %1091 = vmatpush.msra.mxu0 %v802
    %1092 = vmatpush.msra.mxu0 %v794
    %1093 = vmatpush.msra.mxu0 %v786
    %1094 = vmatpush.msra.mxu0 %v778
    %1095 = vmatpush.msra.mxu0 %v770
    %1096 = vmatpush.msra.mxu0 %v762
    %1097 = vmatpush.msra.mxu0 %v754
    %1098 = vmatpush.msra.mxu0 %v746
    %1099 = vmatpush.msra.mxu0 %v738
    %1100 = vmatpush.msra.mxu0 %v730
    %1101 = vmatpush.msra.mxu0 %v722
    %1102 = vmatmul.f32.gmra.mxu0 %v335
    %v1103 = vpop.f32.mrf.mxu0
    %v1104 = vadd.f32 %v1084, %v1103
    %1105 = vdwg.mxu0
    %1106 = vmatpush.msra.mxu0 %v459
    %1107 = vmatpush.msra.mxu0 %v451
    %1108 = vmatpush.msra.mxu0 %v443
    %1109 = vmatpush.msra.mxu0 %v435
    %1110 = vmatpush.msra.mxu0 %v427
    %1111 = vmatpush.msra.mxu0 %v419
    %1112 = vmatpush.msra.mxu0 %v411
    %1113 = vmatpush.msra.mxu0 %v403
    %1114 = vmatpush.msra.mxu0 %v395
    %1115 = vmatpush.msra.mxu0 %v387
    %1116 = vmatpush.msra.mxu0 %v379
    %1117 = vmatpush.msra.mxu0 %v371
    %1118 = vmatpush.msra.mxu0 %v363
    %1119 = vmatpush.msra.mxu0 %v355
    %1120 = vmatpush.msra.mxu0 %v347
    %1121 = vmatpush.msra.mxu0 %v339
    %1122 = vmatmul.f32.gmra.mxu0 %v332
    %v1123 = vpop.f32.mrf.mxu0
    %v1124 = vadd.f32 %v853, %v1123
    %1125 = vdwg.mxu0
    %1126 = vmatpush.msra.mxu0 %v587
    %1127 = vmatpush.msra.mxu0 %v579
    %1128 = vmatpush.msra.mxu0 %v571
    %1129 = vmatpush.msra.mxu0 %v563
    %1130 = vmatpush.msra.mxu0 %v555
    %1131 = vmatpush.msra.mxu0 %v547
    %1132 = vmatpush.msra.mxu0 %v539
    %1133 = vmatpush.msra.mxu0 %v531
    %1134 = vmatpush.msra.mxu0 %v523
    %1135 = vmatpush.msra.mxu0 %v515
    %1136 = vmatpush.msra.mxu0 %v507
    %1137 = vmatpush.msra.mxu0 %v499
    %1138 = vmatpush.msra.mxu0 %v491
    %1139 = vmatpush.msra.mxu0 %v483
    %1140 = vmatpush.msra.mxu0 %v475
    %1141 = vmatpush.msra.mxu0 %v467
    %1142 = vmatmul.f32.gmra.mxu0 %v333
    %v1143 = vpop.f32.mrf.mxu0
    %v1144 = vadd.f32 %v1124, %v1143
    %1145 = vdwg.mxu0
    %1146 = vmatpush.msra.mxu0 %v715
    %1147 = vmatpush.msra.mxu0 %v707
    %1148 = vmatpush.msra.mxu0 %v699
    %1149 = vmatpush.msra.mxu0 %v691
    %1150 = vmatpush.msra.mxu0 %v683
    %1151 = vmatpush.msra.mxu0 %v675
    %1152 = vmatpush.msra.mxu0 %v667
    %1153 = vmatpush.msra.mxu0 %v659
    %1154 = vmatpush.msra.mxu0 %v651
    %1155 = vmatpush.msra.mxu0 %v643
    %1156 = vmatpush.msra.mxu0 %v635
    %1157 = vmatpush.msra.mxu0 %v627
    %1158 = vmatpush.msra.mxu0 %v619
    %1159 = vmatpush.msra.mxu0 %v611
    %1160 = vmatpush.msra.mxu0 %v603
    %1161 = vmatpush.msra.mxu0 %v595
    %1162 = vmatmul.f32.gmra.mxu0 %v334
    %v1163 = vpop.f32.mrf.mxu0
    %v1164 = vadd.f32 %v1144, %v1163
    %1165 = vdwg.mxu0
    %1166 = vmatpush.msra.mxu0 %v843
    %1167 = vmatpush.msra.mxu0 %v835
    %1168 = vmatpush.msra.mxu0 %v827
    %1169 = vmatpush.msra.mxu0 %v819
    %1170 = vmatpush.msra.mxu0 %v811
    %1171 = vmatpush.msra.mxu0 %v803
    %1172 = vmatpush.msra.mxu0 %v795
    %1173 = vmatpush.msra.mxu0 %v787
    %1174 = vmatpush.msra.mxu0 %v779
    %1175 = vmatpush.msra.mxu0 %v771
    %1176 = vmatpush.msra.mxu0 %v763
    %1177 = vmatpush.msra.mxu0 %v755
    %1178 = vmatpush.msra.mxu0 %v747
    %1179 = vmatpush.msra.mxu0 %v739
    %1180 = vmatpush.msra.mxu0 %v731
    %1181 = vmatpush.msra.mxu0 %v723
    %1182 = vmatmul.f32.gmra.mxu0 %v335
    %v1183 = vpop.f32.mrf.mxu0
    %v1184 = vadd.f32 %v1164, %v1183
    %1185 = vdwg.mxu0
    %1186 = vmatpush.msra.mxu0 %v460
    %1187 = vmatpush.msra.mxu0 %v452
    %1188 = vmatpush.msra.mxu0 %v444
    %1189 = vmatpush.msra.mxu0 %v436
    %1190 = vmatpush.msra.mxu0 %v428
    %1191 = vmatpush.msra.mxu0 %v420
    %1192 = vmatpush.msra.mxu0 %v412
    %1193 = vmatpush.msra.mxu0 %v404
    %1194 = vmatpush.msra.mxu0 %v396
    %1195 = vmatpush.msra.mxu0 %v388
    %1196 = vmatpush.msra.mxu0 %v380
    %1197 = vmatpush.msra.mxu0 %v372
    %1198 = vmatpush.msra.mxu0 %v364
    %1199 = vmatpush.msra.mxu0 %v356
    %1200 = vmatpush.msra.mxu0 %v348
    %1201 = vmatpush.msra.mxu0 %v340
    %1202 = vmatmul.f32.gmra.mxu0 %v332
    %v1203 = vpop.f32.mrf.mxu0
    %v1204 = vadd.f32 %v854, %v1203
    %1205 = vdwg.mxu0
    %1206 = vmatpush.msra.mxu0 %v588
    %1207 = vmatpush.msra.mxu0 %v580
    %1208 = vmatpush.msra.mxu0 %v572
    %1209 = vmatpush.msra.mxu0 %v564
    %1210 = vmatpush.msra.mxu0 %v556
    %1211 = vmatpush.msra.mxu0 %v548
    %1212 = vmatpush.msra.mxu0 %v540
    %1213 = vmatpush.msra.mxu0 %v532
    %1214 = vmatpush.msra.mxu0 %v524
    %1215 = vmatpush.msra.mxu0 %v516
    %1216 = vmatpush.msra.mxu0 %v508
    %1217 = vmatpush.msra.mxu0 %v500
    %1218 = vmatpush.msra.mxu0 %v492
    %1219 = vmatpush.msra.mxu0 %v484
    %1220 = vmatpush.msra.mxu0 %v476
    %1221 = vmatpush.msra.mxu0 %v468
    %1222 = vmatmul.f32.gmra.mxu0 %v333
    %v1223 = vpop.f32.mrf.mxu0
    %v1224 = vadd.f32 %v1204, %v1223
    %1225 = vdwg.mxu0
    %1226 = vmatpush.msra.mxu0 %v716
    %1227 = vmatpush.msra.mxu0 %v708
    %1228 = vmatpush.msra.mxu0 %v700
    %1229 = vmatpush.msra.mxu0 %v692
    %1230 = vmatpush.msra.mxu0 %v684
    %1231 = vmatpush.msra.mxu0 %v676
    %1232 = vmatpush.msra.mxu0 %v668
    %1233 = vmatpush.msra.mxu0 %v660
    %1234 = vmatpush.msra.mxu0 %v652
    %1235 = vmatpush.msra.mxu0 %v644
    %1236 = vmatpush.msra.mxu0 %v636
    %1237 = vmatpush.msra.mxu0 %v628
    %1238 = vmatpush.msra.mxu0 %v620
    %1239 = vmatpush.msra.mxu0 %v612
    %1240 = vmatpush.msra.mxu0 %v604
    %1241 = vmatpush.msra.mxu0 %v596
    %1242 = vmatmul.f32.gmra.mxu0 %v334
    %v1243 = vpop.f32.mrf.mxu0
    %v1244 = vadd.f32 %v1224, %v1243
    %1245 = vdwg.mxu0
    %1246 = vmatpush.msra.mxu0 %v844
    %1247 = vmatpush.msra.mxu0 %v836
    %1248 = vmatpush.msra.mxu0 %v828
    %1249 = vmatpush.msra.mxu0 %v820
    %1250 = vmatpush.msra.mxu0 %v812
    %1251 = vmatpush.msra.mxu0 %v804
    %1252 = vmatpush.msra.mxu0 %v796
    %1253 = vmatpush.msra.mxu0 %v788
    %1254 = vmatpush.msra.mxu0 %v780
    %1255 = vmatpush.msra.mxu0 %v772
    %1256 = vmatpush.msra.mxu0 %v764
    %1257 = vmatpush.msra.mxu0 %v756
    %1258 = vmatpush.msra.mxu0 %v748
    %1259 = vmatpush.msra.mxu0 %v740
    %1260 = vmatpush.msra.mxu0 %v732
    %1261 = vmatpush.msra.mxu0 %v724
    %1262 = vmatmul.f32.gmra.mxu0 %v335
    %v1263 = vpop.f32.mrf.mxu0
    %v1264 = vadd.f32 %v1244, %v1263
    %1265 = vdwg.mxu0
    %1266 = vmatpush.msra.mxu0 %v461
    %1267 = vmatpush.msra.mxu0 %v453
    %1268 = vmatpush.msra.mxu0 %v445
    %1269 = vmatpush.msra.mxu0 %v437
    %1270 = vmatpush.msra.mxu0 %v429
    %1271 = vmatpush.msra.mxu0 %v421
    %1272 = vmatpush.msra.mxu0 %v413
    %1273 = vmatpush.msra.mxu0 %v405
    %1274 = vmatpush.msra.mxu0 %v397
    %1275 = vmatpush.msra.mxu0 %v389
    %1276 = vmatpush.msra.mxu0 %v381
    %1277 = vmatpush.msra.mxu0 %v373
    %1278 = vmatpush.msra.mxu0 %v365
    %1279 = vmatpush.msra.mxu0 %v357
    %1280 = vmatpush.msra.mxu0 %v349
    %1281 = vmatpush.msra.mxu0 %v341
    %1282 = vmatmul.f32.gmra.mxu0 %v332
    %v1283 = vpop.f32.mrf.mxu0
    %v1284 = vadd.f32 %v855, %v1283
    %1285 = vdwg.mxu0
    %1286 = vmatpush.msra.mxu0 %v589
    %1287 = vmatpush.msra.mxu0 %v581
    %1288 = vmatpush.msra.mxu0 %v573
    %1289 = vmatpush.msra.mxu0 %v565
    %1290 = vmatpush.msra.mxu0 %v557
    %1291 = vmatpush.msra.mxu0 %v549
    %1292 = vmatpush.msra.mxu0 %v541
    %1293 = vmatpush.msra.mxu0 %v533
    %1294 = vmatpush.msra.mxu0 %v525
    %1295 = vmatpush.msra.mxu0 %v517
    %1296 = vmatpush.msra.mxu0 %v509
    %1297 = vmatpush.msra.mxu0 %v501
    %1298 = vmatpush.msra.mxu0 %v493
    %1299 = vmatpush.msra.mxu0 %v485
    %1300 = vmatpush.msra.mxu0 %v477
    %1301 = vmatpush.msra.mxu0 %v469
    %1302 = vmatmul.f32.gmra.mxu0 %v333
    %v1303 = vpop.f32.mrf.mxu0
    %v1304 = vadd.f32 %v1284, %v1303
    %1305 = vdwg.mxu0
    %1306 = vmatpush.msra.mxu0 %v717
    %1307 = vmatpush.msra.mxu0 %v709
    %1308 = vmatpush.msra.mxu0 %v701
    %1309 = vmatpush.msra.mxu0 %v693
    %1310 = vmatpush.msra.mxu0 %v685
    %1311 = vmatpush.msra.mxu0 %v677
    %1312 = vmatpush.msra.mxu0 %v669
    %1313 = vmatpush.msra.mxu0 %v661
    %1314 = vmatpush.msra.mxu0 %v653
    %1315 = vmatpush.msra.mxu0 %v645
    %1316 = vmatpush.msra.mxu0 %v637
    %1317 = vmatpush.msra.mxu0 %v629
    %1318 = vmatpush.msra.mxu0 %v621
    %1319 = vmatpush.msra.mxu0 %v613
    %1320 = vmatpush.msra.mxu0 %v605
    %1321 = vmatpush.msra.mxu0 %v597
    %1322 = vmatmul.f32.gmra.mxu0 %v334
    %v1323 = vpop.f32.mrf.mxu0
    %v1324 = vadd.f32 %v1304, %v1323
    %1325 = vdwg.mxu0
    %1326 = vmatpush.msra.mxu0 %v845
    %1327 = vmatpush.msra.mxu0 %v837
    %1328 = vmatpush.msra.mxu0 %v829
    %1329 = vmatpush.msra.mxu0 %v821
    %1330 = vmatpush.msra.mxu0 %v813
    %1331 = vmatpush.msra.mxu0 %v805
    %1332 = vmatpush.msra.mxu0 %v797
    %1333 = vmatpush.msra.mxu0 %v789
    %1334 = vmatpush.msra.mxu0 %v781
    %1335 = vmatpush.msra.mxu0 %v773
    %1336 = vmatpush.msra.mxu0 %v765
    %1337 = vmatpush.msra.mxu0 %v757
    %1338 = vmatpush.msra.mxu0 %v749
    %1339 = vmatpush.msra.mxu0 %v741
    %1340 = vmatpush.msra.mxu0 %v733
    %1341 = vmatpush.msra.mxu0 %v725
    %1342 = vmatmul.f32.gmra.mxu0 %v335
    %v1343 = vpop.f32.mrf.mxu0
    %v1344 = vadd.f32 %v1324, %v1343
    %1345 = vdwg.mxu0
    %1346 = vmatpush.msra.mxu0 %v462
    %1347 = vmatpush.msra.mxu0 %v454
    %1348 = vmatpush.msra.mxu0 %v446
    %1349 = vmatpush.msra.mxu0 %v438
    %1350 = vmatpush.msra.mxu0 %v430
    %1351 = vmatpush.msra.mxu0 %v422
    %1352 = vmatpush.msra.mxu0 %v414
    %1353 = vmatpush.msra.mxu0 %v406
    %1354 = vmatpush.msra.mxu0 %v398
    %1355 = vmatpush.msra.mxu0 %v390
    %1356 = vmatpush.msra.mxu0 %v382
    %1357 = vmatpush.msra.mxu0 %v374
    %1358 = vmatpush.msra.mxu0 %v366
    %1359 = vmatpush.msra.mxu0 %v358
    %1360 = vmatpush.msra.mxu0 %v350
    %1361 = vmatpush.msra.mxu0 %v342
    %1362 = vmatmul.f32.gmra.mxu0 %v332
    %v1363 = vpop.f32.mrf.mxu0
    %v1364 = vadd.f32 %v856, %v1363
    %1365 = vdwg.mxu0
    %1366 = vmatpush.msra.mxu0 %v590
    %1367 = vmatpush.msra.mxu0 %v582
    %1368 = vmatpush.msra.mxu0 %v574
    %1369 = vmatpush.msra.mxu0 %v566
    %1370 = vmatpush.msra.mxu0 %v558
    %1371 = vmatpush.msra.mxu0 %v550
    %1372 = vmatpush.msra.mxu0 %v542
    %1373 = vmatpush.msra.mxu0 %v534
    %1374 = vmatpush.msra.mxu0 %v526
    %1375 = vmatpush.msra.mxu0 %v518
    %1376 = vmatpush.msra.mxu0 %v510
    %1377 = vmatpush.msra.mxu0 %v502
    %1378 = vmatpush.msra.mxu0 %v494
    %1379 = vmatpush.msra.mxu0 %v486
    %1380 = vmatpush.msra.mxu0 %v478
    %1381 = vmatpush.msra.mxu0 %v470
    %1382 = vmatmul.f32.gmra.mxu0 %v333
    %v1383 = vpop.f32.mrf.mxu0
    %v1384 = vadd.f32 %v1364, %v1383
    %1385 = vdwg.mxu0
    %1386 = vmatpush.msra.mxu0 %v718
    %1387 = vmatpush.msra.mxu0 %v710
    %1388 = vmatpush.msra.mxu0 %v702
    %1389 = vmatpush.msra.mxu0 %v694
    %1390 = vmatpush.msra.mxu0 %v686
    %1391 = vmatpush.msra.mxu0 %v678
    %1392 = vmatpush.msra.mxu0 %v670
    %1393 = vmatpush.msra.mxu0 %v662
    %1394 = vmatpush.msra.mxu0 %v654
    %1395 = vmatpush.msra.mxu0 %v646
    %1396 = vmatpush.msra.mxu0 %v638
    %1397 = vmatpush.msra.mxu0 %v630
    %1398 = vmatpush.msra.mxu0 %v622
    %1399 = vmatpush.msra.mxu0 %v614
    %1400 = vmatpush.msra.mxu0 %v606
    %1401 = vmatpush.msra.mxu0 %v598
    %1402 = vmatmul.f32.gmra.mxu0 %v334
    %v1403 = vpop.f32.mrf.mxu0
    %v1404 = vadd.f32 %v1384, %v1403
    %1405 = vdwg.mxu0
    %1406 = vmatpush.msra.mxu0 %v846
    %1407 = vmatpush.msra.mxu0 %v838
    %1408 = vmatpush.msra.mxu0 %v830
    %1409 = vmatpush.msra.mxu0 %v822
    %1410 = vmatpush.msra.mxu0 %v814
    %1411 = vmatpush.msra.mxu0 %v806
    %1412 = vmatpush.msra.mxu0 %v798
    %1413 = vmatpush.msra.mxu0 %v790
    %1414 = vmatpush.msra.mxu0 %v782
    %1415 = vmatpush.msra.mxu0 %v774
    %1416 = vmatpush.msra.mxu0 %v766
    %1417 = vmatpush.msra.mxu0 %v758
    %1418 = vmatpush.msra.mxu0 %v750
    %1419 = vmatpush.msra.mxu0 %v742
    %1420 = vmatpush.msra.mxu0 %v734
    %1421 = vmatpush.msra.mxu0 %v726
    %1422 = vmatmul.f32.gmra.mxu0 %v335
    %v1423 = vpop.f32.mrf.mxu0
    %v1424 = vadd.f32 %v1404, %v1423
    %1425 = vdwg.mxu0
    %1426 = vmatpush.msra.mxu0 %v463
    %1427 = vmatpush.msra.mxu0 %v455
    %1428 = vmatpush.msra.mxu0 %v447
    %1429 = vmatpush.msra.mxu0 %v439
    %1430 = vmatpush.msra.mxu0 %v431
    %1431 = vmatpush.msra.mxu0 %v423
    %1432 = vmatpush.msra.mxu0 %v415
    %1433 = vmatpush.msra.mxu0 %v407
    %1434 = vmatpush.msra.mxu0 %v399
    %1435 = vmatpush.msra.mxu0 %v391
    %1436 = vmatpush.msra.mxu0 %v383
    %1437 = vmatpush.msra.mxu0 %v375
    %1438 = vmatpush.msra.mxu0 %v367
    %1439 = vmatpush.msra.mxu0 %v359
    %1440 = vmatpush.msra.mxu0 %v351
    %1441 = vmatpush.msra.mxu0 %v343
    %1442 = vmatmul.f32.gmra.mxu0 %v332
    %v1443 = vpop.f32.mrf.mxu0
    %v1444 = vadd.f32 %v857, %v1443
    %1445 = vdwg.mxu0
    %1446 = vmatpush.msra.mxu0 %v591
    %1447 = vmatpush.msra.mxu0 %v583
    %1448 = vmatpush.msra.mxu0 %v575
    %1449 = vmatpush.msra.mxu0 %v567
    %1450 = vmatpush.msra.mxu0 %v559
    %1451 = vmatpush.msra.mxu0 %v551
    %1452 = vmatpush.msra.mxu0 %v543
    %1453 = vmatpush.msra.mxu0 %v535
    %1454 = vmatpush.msra.mxu0 %v527
    %1455 = vmatpush.msra.mxu0 %v519
    %1456 = vmatpush.msra.mxu0 %v511
    %1457 = vmatpush.msra.mxu0 %v503
    %1458 = vmatpush.msra.mxu0 %v495
    %1459 = vmatpush.msra.mxu0 %v487
    %1460 = vmatpush.msra.mxu0 %v479
    %1461 = vmatpush.msra.mxu0 %v471
    %1462 = vmatmul.f32.gmra.mxu0 %v333
    %v1463 = vpop.f32.mrf.mxu0
    %v1464 = vadd.f32 %v1444, %v1463
    %1465 = vdwg.mxu0
    %1466 = vmatpush.msra.mxu0 %v719
    %1467 = vmatpush.msra.mxu0 %v711
    %1468 = vmatpush.msra.mxu0 %v703
    %1469 = vmatpush.msra.mxu0 %v695
    %1470 = vmatpush.msra.mxu0 %v687
    %1471 = vmatpush.msra.mxu0 %v679
    %1472 = vmatpush.msra.mxu0 %v671
    %1473 = vmatpush.msra.mxu0 %v663
    %1474 = vmatpush.msra.mxu0 %v655
    %1475 = vmatpush.msra.mxu0 %v647
    %1476 = vmatpush.msra.mxu0 %v639
    %1477 = vmatpush.msra.mxu0 %v631
    %1478 = vmatpush.msra.mxu0 %v623
    %1479 = vmatpush.msra.mxu0 %v615
    %1480 = vmatpush.msra.mxu0 %v607
    %1481 = vmatpush.msra.mxu0 %v599
    %1482 = vmatmul.f32.gmra.mxu0 %v334
    %v1483 = vpop.f32.mrf.mxu0
    %v1484 = vadd.f32 %v1464, %v1483
    %1485 = vdwg.mxu0
    %1486 = vmatpush.msra.mxu0 %v847
    %1487 = vmatpush.msra.mxu0 %v839
    %1488 = vmatpush.msra.mxu0 %v831
    %1489 = vmatpush.msra.mxu0 %v823
    %1490 = vmatpush.msra.mxu0 %v815
    %1491 = vmatpush.msra.mxu0 %v807
    %1492 = vmatpush.msra.mxu0 %v799
    %1493 = vmatpush.msra.mxu0 %v791
    %1494 = vmatpush.msra.mxu0 %v783
    %1495 = vmatpush.msra.mxu0 %v775
    %1496 = vmatpush.msra.mxu0 %v767
    %1497 = vmatpush.msra.mxu0 %v759
    %1498 = vmatpush.msra.mxu0 %v751
    %1499 = vmatpush.msra.mxu0 %v743
    %1500 = vmatpush.msra.mxu0 %v735
    %1501 = vmatpush.msra.mxu0 %v727
    %1502 = vmatmul.f32.gmra.mxu0 %v335
    %v1503 = vpop.f32.mrf.mxu0
    %v1504 = vadd.f32 %v1484, %v1503
    %1505 = vdwg.mxu0
    %v1506 = vmax.f32 %v944, 0.0
    %v1507 = vmax.f32 %v1024, 0.0
    %v1508 = vmax.f32 %v1104, 0.0
    %v1509 = vmax.f32 %v1184, 0.0
    %v1510 = vmax.f32 %v1264, 0.0
    %v1511 = vmax.f32 %v1344, 0.0
    %v1512 = vmax.f32 %v1424, 0.0
    %v1513 = vmax.f32 %v1504, 0.0
    %v1514 = vld [vmem:[%s5] sm:$0xff]
    %v1515 = vld [vmem:[%s5 + $0x8] sm:$0xff]
    %v1516 = vld [vmem:[%s5 + $0x10] sm:$0xff]
    %v1517 = vld [vmem:[%s5 + $0x18] sm:$0xff]
    %v1518 = vld [vmem:[%s5 + $0x20] sm:$0xff]
    %v1519 = vld [vmem:[%s5 + $0x28] sm:$0xff]
    %v1520 = vld [vmem:[%s5 + $0x30] sm:$0xff]
    %v1521 = vld [vmem:[%s5 + $0x38] sm:$0xff]
    %v1522 = vld [vmem:[%s5 + $0x40] sm:$0xff]
    %v1523 = vld [vmem:[%s5 + $0x48] sm:$0xff]
    %v1524 = vld [vmem:[%s5 + $0x50] sm:$0xff]
    %v1525 = vld [vmem:[%s5 + $0x58] sm:$0xff]
    %v1526 = vld [vmem:[%s5 + $0x60] sm:$0xff]
    %v1527 = vld [vmem:[%s5 + $0x68] sm:$0xff]
    %v1528 = vld [vmem:[%s5 + $0x70] sm:$0xff]
    %v1529 = vld [vmem:[%s5 + $0x78] sm:$0xff]
    %v1530 = vld [vmem:[%s5 + $0x80] sm:$0xff]
    %v1531 = vld [vmem:[%s5 + $0x88] sm:$0xff]
    %v1532 = vld [vmem:[%s5 + $0x90] sm:$0xff]
    %v1533 = vld [vmem:[%s5 + $0x98] sm:$0xff]
    %v1534 = vld [vmem:[%s5 + $0xa0] sm:$0xff]
    %v1535 = vld [vmem:[%s5 + $0xa8] sm:$0xff]
    %v1536 = vld [vmem:[%s5 + $0xb0] sm:$0xff]
    %v1537 = vld [vmem:[%s5 + $0xb8] sm:$0xff]
    %v1538 = vld [vmem:[%s5 + $0xc0] sm:$0xff]
    %v1539 = vld [vmem:[%s5 + $0xc8] sm:$0xff]
    %v1540 = vld [vmem:[%s5 + $0xd0] sm:$0xff]
    %v1541 = vld [vmem:[%s5 + $0xd8] sm:$0xff]
    %v1542 = vld [vmem:[%s5 + $0xe0] sm:$0xff]
    %v1543 = vld [vmem:[%s5 + $0xe8] sm:$0xff]
    %v1544 = vld [vmem:[%s5 + $0xf0] sm:$0xff]
    %v1545 = vld [vmem:[%s5 + $0xf8] sm:$0xff]
    %v1546 = vld [vmem:[%s5 + $0x100] sm:$0xff]
    %v1547 = vld [vmem:[%s5 + $0x108] sm:$0xff]
    %v1548 = vld [vmem:[%s5 + $0x110] sm:$0xff]
    %v1549 = vld [vmem:[%s5 + $0x118] sm:$0xff]
    %v1550 = vld [vmem:[%s5 + $0x120] sm:$0xff]
    %v1551 = vld [vmem:[%s5 + $0x128] sm:$0xff]
    %v1552 = vld [vmem:[%s5 + $0x130] sm:$0xff]
    %v1553 = vld [vmem:[%s5 + $0x138] sm:$0xff]
    %v1554 = vld [vmem:[%s5 + $0x140] sm:$0xff]
    %v1555 = vld [vmem:[%s5 + $0x148] sm:$0xff]
    %v1556 = vld [vmem:[%s5 + $0x150] sm:$0xff]
    %v1557 = vld [vmem:[%s5 + $0x158] sm:$0xff]
    %v1558 = vld [vmem:[%s5 + $0x160] sm:$0xff]
    %v1559 = vld [vmem:[%s5 + $0x168] sm:$0xff]
    %v1560 = vld [vmem:[%s5 + $0x170] sm:$0xff]
    %v1561 = vld [vmem:[%s5 + $0x178] sm:$0xff]
    %v1562 = vld [vmem:[%s5 + $0x180] sm:$0xff]
    %v1563 = vld [vmem:[%s5 + $0x188] sm:$0xff]
    %v1564 = vld [vmem:[%s5 + $0x190] sm:$0xff]
    %v1565 = vld [vmem:[%s5 + $0x198] sm:$0xff]
    %v1566 = vld [vmem:[%s5 + $0x1a0] sm:$0xff]
    %v1567 = vld [vmem:[%s5 + $0x1a8] sm:$0xff]
    %v1568 = vld [vmem:[%s5 + $0x1b0] sm:$0xff]
    %v1569 = vld [vmem:[%s5 + $0x1b8] sm:$0xff]
    %v1570 = vld [vmem:[%s5 + $0x1c0] sm:$0xff]
    %v1571 = vld [vmem:[%s5 + $0x1c8] sm:$0xff]
    %v1572 = vld [vmem:[%s5 + $0x1d0] sm:$0xff]
    %v1573 = vld [vmem:[%s5 + $0x1d8] sm:$0xff]
    %v1574 = vld [vmem:[%s5 + $0x1e0] sm:$0xff]
    %v1575 = vld [vmem:[%s5 + $0x1e8] sm:$0xff]
    %v1576 = vld [vmem:[%s5 + $0x1f0] sm:$0xff]
    %v1577 = vld [vmem:[%s5 + $0x1f8] sm:$0xff]
    %v1578 = vld [vmem:[%s5 + $0x200] sm:$0xff]
    %v1579 = vld [vmem:[%s5 + $0x208] sm:$0xff]
    %v1580 = vld [vmem:[%s5 + $0x210] sm:$0xff]
    %v1581 = vld [vmem:[%s5 + $0x218] sm:$0xff]
    %v1582 = vld [vmem:[%s5 + $0x220] sm:$0xff]
    %v1583 = vld [vmem:[%s5 + $0x228] sm:$0xff]
    %v1584 = vld [vmem:[%s5 + $0x230] sm:$0xff]
    %v1585 = vld [vmem:[%s5 + $0x238] sm:$0xff]
    %v1586 = vld [vmem:[%s5 + $0x240] sm:$0xff]
    %v1587 = vld [vmem:[%s5 + $0x248] sm:$0xff]
    %v1588 = vld [vmem:[%s5 + $0x250] sm:$0xff]
    %v1589 = vld [vmem:[%s5 + $0x258] sm:$0xff]
    %v1590 = vld [vmem:[%s5 + $0x260] sm:$0xff]
    %v1591 = vld [vmem:[%s5 + $0x268] sm:$0xff]
    %v1592 = vld [vmem:[%s5 + $0x270] sm:$0xff]
    %v1593 = vld [vmem:[%s5 + $0x278] sm:$0xff]
    %v1594 = vld [vmem:[%s5 + $0x280] sm:$0xff]
    %v1595 = vld [vmem:[%s5 + $0x288] sm:$0xff]
    %v1596 = vld [vmem:[%s5 + $0x290] sm:$0xff]
    %v1597 = vld [vmem:[%s5 + $0x298] sm:$0xff]
    %v1598 = vld [vmem:[%s5 + $0x2a0] sm:$0xff]
    %v1599 = vld [vmem:[%s5 + $0x2a8] sm:$0xff]
    %v1600 = vld [vmem:[%s5 + $0x2b0] sm:$0xff]
    %v1601 = vld [vmem:[%s5 + $0x2b8] sm:$0xff]
    %v1602 = vld [vmem:[%s5 + $0x2c0] sm:$0xff]
    %v1603 = vld [vmem:[%s5 + $0x2c8] sm:$0xff]
    %v1604 = vld [vmem:[%s5 + $0x2d0] sm:$0xff]
    %v1605 = vld [vmem:[%s5 + $0x2d8] sm:$0xff]
    %v1606 = vld [vmem:[%s5 + $0x2e0] sm:$0xff]
    %v1607 = vld [vmem:[%s5 + $0x2e8] sm:$0xff]
    %v1608 = vld [vmem:[%s5 + $0x2f0] sm:$0xff]
    %v1609 = vld [vmem:[%s5 + $0x2f8] sm:$0xff]
    %v1610 = vld [vmem:[%s5 + $0x300] sm:$0xff]
    %v1611 = vld [vmem:[%s5 + $0x308] sm:$0xff]
    %v1612 = vld [vmem:[%s5 + $0x310] sm:$0xff]
    %v1613 = vld [vmem:[%s5 + $0x318] sm:$0xff]
    %v1614 = vld [vmem:[%s5 + $0x320] sm:$0xff]
    %v1615 = vld [vmem:[%s5 + $0x328] sm:$0xff]
    %v1616 = vld [vmem:[%s5 + $0x330] sm:$0xff]
    %v1617 = vld [vmem:[%s5 + $0x338] sm:$0xff]
    %v1618 = vld [vmem:[%s5 + $0x340] sm:$0xff]
    %v1619 = vld [vmem:[%s5 + $0x348] sm:$0xff]
    %v1620 = vld [vmem:[%s5 + $0x350] sm:$0xff]
    %v1621 = vld [vmem:[%s5 + $0x358] sm:$0xff]
    %v1622 = vld [vmem:[%s5 + $0x360] sm:$0xff]
    %v1623 = vld [vmem:[%s5 + $0x368] sm:$0xff]
    %v1624 = vld [vmem:[%s5 + $0x370] sm:$0xff]
    %v1625 = vld [vmem:[%s5 + $0x378] sm:$0xff]
    %v1626 = vld [vmem:[%s5 + $0x380] sm:$0xff]
    %v1627 = vld [vmem:[%s5 + $0x388] sm:$0xff]
    %v1628 = vld [vmem:[%s5 + $0x390] sm:$0xff]
    %v1629 = vld [vmem:[%s5 + $0x398] sm:$0xff]
    %v1630 = vld [vmem:[%s5 + $0x3a0] sm:$0xff]
    %v1631 = vld [vmem:[%s5 + $0x3a8] sm:$0xff]
    %v1632 = vld [vmem:[%s5 + $0x3b0] sm:$0xff]
    %v1633 = vld [vmem:[%s5 + $0x3b8] sm:$0xff]
    %v1634 = vld [vmem:[%s5 + $0x3c0] sm:$0xff]
    %v1635 = vld [vmem:[%s5 + $0x3c8] sm:$0xff]
    %v1636 = vld [vmem:[%s5 + $0x3d0] sm:$0xff]
    %v1637 = vld [vmem:[%s5 + $0x3d8] sm:$0xff]
    %v1638 = vld [vmem:[%s5 + $0x3e0] sm:$0xff]
    %v1639 = vld [vmem:[%s5 + $0x3e8] sm:$0xff]
    %v1640 = vld [vmem:[%s5 + $0x3f0] sm:$0xff]
    %v1641 = vld [vmem:[%s5 + $0x3f8] sm:$0xff]
    %v1642 = vld [vmem:[%s6] sm:$0x1]
    %v1644 = vperm.slane %v1642, 0
    %1646 = vmatpush.msra.mxu0 %v1529
    %1647 = vmatpush.msra.mxu0 %v1528
    %1648 = vmatpush.msra.mxu0 %v1527
    %1649 = vmatpush.msra.mxu0 %v1526
    %1650 = vmatpush.msra.mxu0 %v1525
    %1651 = vmatpush.msra.mxu0 %v1524
    %1652 = vmatpush.msra.mxu0 %v1523
    %1653 = vmatpush.msra.mxu0 %v1522
    %1654 = vmatpush.msra.mxu0 %v1521
    %1655 = vmatpush.msra.mxu0 %v1520
    %1656 = vmatpush.msra.mxu0 %v1519
    %1657 = vmatpush.msra.mxu0 %v1518
    %1658 = vmatpush.msra.mxu0 %v1517
    %1659 = vmatpush.msra.mxu0 %v1516
    %1660 = vmatpush.msra.mxu0 %v1515
    %1661 = vmatpush.msra.mxu0 %v1514
    %1662 = vmatmul.f32.gmra.mxu0 %v1506
    %v1663 = vpop.f32.mrf.mxu0
    %v1664 = vadd.f32 %v1644, %v1663
    %1665 = vdwg.mxu0
    %1666 = vmatpush.msra.mxu0 %v1545
    %1667 = vmatpush.msra.mxu0 %v1544
    %1668 = vmatpush.msra.mxu0 %v1543
    %1669 = vmatpush.msra.mxu0 %v1542
    %1670 = vmatpush.msra.mxu0 %v1541
    %1671 = vmatpush.msra.mxu0 %v1540
    %1672 = vmatpush.msra.mxu0 %v1539
    %1673 = vmatpush.msra.mxu0 %v1538
    %1674 = vmatpush.msra.mxu0 %v1537
    %1675 = vmatpush.msra.mxu0 %v1536
    %1676 = vmatpush.msra.mxu0 %v1535
    %1677 = vmatpush.msra.mxu0 %v1534
    %1678 = vmatpush.msra.mxu0 %v1533
    %1679 = vmatpush.msra.mxu0 %v1532
    %1680 = vmatpush.msra.mxu0 %v1531
    %1681 = vmatpush.msra.mxu0 %v1530
    %1682 = vmatmul.f32.gmra.mxu0 %v1507
    %v1683 = vpop.f32.mrf.mxu0
    %v1684 = vadd.f32 %v1664, %v1683
    %1685 = vdwg.mxu0
    %1686 = vmatpush.msra.mxu0 %v1561
    %1687 = vmatpush.msra.mxu0 %v1560
    %1688 = vmatpush.msra.mxu0 %v1559
    %1689 = vmatpush.msra.mxu0 %v1558
    %1690 = vmatpush.msra.mxu0 %v1557
    %1691 = vmatpush.msra.mxu0 %v1556
    %1692 = vmatpush.msra.mxu0 %v1555
    %1693 = vmatpush.msra.mxu0 %v1554
    %1694 = vmatpush.msra.mxu0 %v1553
    %1695 = vmatpush.msra.mxu0 %v1552
    %1696 = vmatpush.msra.mxu0 %v1551
    %1697 = vmatpush.msra.mxu0 %v1550
    %1698 = vmatpush.msra.mxu0 %v1549
    %1699 = vmatpush.msra.mxu0 %v1548
    %1700 = vmatpush.msra.mxu0 %v1547
    %1701 = vmatpush.msra.mxu0 %v1546
    %1702 = vmatmul.f32.gmra.mxu0 %v1508
    %v1703 = vpop.f32.mrf.mxu0
    %v1704 = vadd.f32 %v1684, %v1703
    %1705 = vdwg.mxu0
    %1706 = vmatpush.msra.mxu0 %v1577
    %1707 = vmatpush.msra.mxu0 %v1576
    %1708 = vmatpush.msra.mxu0 %v1575
    %1709 = vmatpush.msra.mxu0 %v1574
    %1710 = vmatpush.msra.mxu0 %v1573
    %1711 = vmatpush.msra.mxu0 %v1572
    %1712 = vmatpush.msra.mxu0 %v1571
    %1713 = vmatpush.msra.mxu0 %v1570
    %1714 = vmatpush.msra.mxu0 %v1569
    %1715 = vmatpush.msra.mxu0 %v1568
    %1716 = vmatpush.msra.mxu0 %v1567
    %1717 = vmatpush.msra.mxu0 %v1566
    %1718 = vmatpush.msra.mxu0 %v1565
    %1719 = vmatpush.msra.mxu0 %v1564
    %1720 = vmatpush.msra.mxu0 %v1563
    %1721 = vmatpush.msra.mxu0 %v1562
    %1722 = vmatmul.f32.gmra.mxu0 %v1509
    %v1723 = vpop.f32.mrf.mxu0
    %v1724 = vadd.f32 %v1704, %v1723
    %1725 = vdwg.mxu0
    %1726 = vmatpush.msra.mxu0 %v1593
    %1727 = vmatpush.msra.mxu0 %v1592
    %1728 = vmatpush.msra.mxu0 %v1591
    %1729 = vmatpush.msra.mxu0 %v1590
    %1730 = vmatpush.msra.mxu0 %v1589
    %1731 = vmatpush.msra.mxu0 %v1588
    %1732 = vmatpush.msra.mxu0 %v1587
    %1733 = vmatpush.msra.mxu0 %v1586
    %1734 = vmatpush.msra.mxu0 %v1585
    %1735 = vmatpush.msra.mxu0 %v1584
    %1736 = vmatpush.msra.mxu0 %v1583
    %1737 = vmatpush.msra.mxu0 %v1582
    %1738 = vmatpush.msra.mxu0 %v1581
    %1739 = vmatpush.msra.mxu0 %v1580
    %1740 = vmatpush.msra.mxu0 %v1579
    %1741 = vmatpush.msra.mxu0 %v1578
    %1742 = vmatmul.f32.gmra.mxu0 %v1510
    %v1743 = vpop.f32.mrf.mxu0
    %v1744 = vadd.f32 %v1724, %v1743
    %1745 = vdwg.mxu0
    %1746 = vmatpush.msra.mxu0 %v1609
    %1747 = vmatpush.msra.mxu0 %v1608
    %1748 = vmatpush.msra.mxu0 %v1607
    %1749 = vmatpush.msra.mxu0 %v1606
    %1750 = vmatpush.msra.mxu0 %v1605
    %1751 = vmatpush.msra.mxu0 %v1604
    %1752 = vmatpush.msra.mxu0 %v1603
    %1753 = vmatpush.msra.mxu0 %v1602
    %1754 = vmatpush.msra.mxu0 %v1601
    %1755 = vmatpush.msra.mxu0 %v1600
    %1756 = vmatpush.msra.mxu0 %v1599
    %1757 = vmatpush.msra.mxu0 %v1598
    %1758 = vmatpush.msra.mxu0 %v1597
    %1759 = vmatpush.msra.mxu0 %v1596
    %1760 = vmatpush.msra.mxu0 %v1595
    %1761 = vmatpush.msra.mxu0 %v1594
    %1762 = vmatmul.f32.gmra.mxu0 %v1511
    %v1763 = vpop.f32.mrf.mxu0
    %v1764 = vadd.f32 %v1744, %v1763
    %1765 = vdwg.mxu0
    %1766 = vmatpush.msra.mxu0 %v1625
    %1767 = vmatpush.msra.mxu0 %v1624
    %1768 = vmatpush.msra.mxu0 %v1623
    %1769 = vmatpush.msra.mxu0 %v1622
    %1770 = vmatpush.msra.mxu0 %v1621
    %1771 = vmatpush.msra.mxu0 %v1620
    %1772 = vmatpush.msra.mxu0 %v1619
    %1773 = vmatpush.msra.mxu0 %v1618
    %1774 = vmatpush.msra.mxu0 %v1617
    %1775 = vmatpush.msra.mxu0 %v1616
    %1776 = vmatpush.msra.mxu0 %v1615
    %1777 = vmatpush.msra.mxu0 %v1614
    %1778 = vmatpush.msra.mxu0 %v1613
    %1779 = vmatpush.msra.mxu0 %v1612
    %1780 = vmatpush.msra.mxu0 %v1611
    %1781 = vmatpush.msra.mxu0 %v1610
    %1782 = vmatmul.f32.gmra.mxu0 %v1512
    %v1783 = vpop.f32.mrf.mxu0
    %v1784 = vadd.f32 %v1764, %v1783
    %1785 = vdwg.mxu0
    %1786 = vmatpush.msra.mxu0 %v1641
    %1787 = vmatpush.msra.mxu0 %v1640
    %1788 = vmatpush.msra.mxu0 %v1639
    %1789 = vmatpush.msra.mxu0 %v1638
    %1790 = vmatpush.msra.mxu0 %v1637
    %1791 = vmatpush.msra.mxu0 %v1636
    %1792 = vmatpush.msra.mxu0 %v1635
    %1793 = vmatpush.msra.mxu0 %v1634
    %1794 = vmatpush.msra.mxu0 %v1633
    %1795 = vmatpush.msra.mxu0 %v1632
    %1796 = vmatpush.msra.mxu0 %v1631
    %1797 = vmatpush.msra.mxu0 %v1630
    %1798 = vmatpush.msra.mxu0 %v1629
    %1799 = vmatpush.msra.mxu0 %v1628
    %1800 = vmatpush.msra.mxu0 %v1627
    %1801 = vmatpush.msra.mxu0 %v1626
    %1802 = vmatmul.f32.gmra.mxu0 %v1513
    %v1803 = vpop.f32.mrf.mxu0
    %v1804 = vadd.f32 %v1784, %v1803
    %1805 = vdwg.mxu0
    %vm1806 = vcmask 41984
    %v1807 = vsel %vm1806, %v1804, -inf
    %1808 = vmax.xlane.f32.xlu0 %v1807
    %v1809 = vpop.xlane.xlu0 %1808
    %v1810 = vsub.f32 %v1804, %v1809
    %v1811 = vmul.f32 %v1810, 1.442695
    %v1812 = vpow.pop %v1811
    %v1813 = vsel %vm1806, %v1812, 0.0
    %1814 = vadd.xlane.f32.xlu0 %v1813
    %v1815 = vpop.xlane.xlu0 %1814
    %v1816 = vlog2.pop %v1815
    %v1817 = vmul.f32 %v1816, 0.6931472
    %v1818 = vadd.f32 %v1817, %v1809
    %v1819 = vsub.f32 %v1804, %v1818
    %1820 = vst.msk [vmem:[#allocation2] sm:$0x3] %vm1806, %v1819
    // Predicated region
    $region30: #{net_tgcn_forward.1} parent=1 // pred_check
      _
    $region31: #{net_tgcn_forward.1} parent=1 // pred_check_branch
      %1822 = sbr.rel (0) target = $region33
    $region32: #{net_tgcn_forward.1} parent=1 // pred_region
      %1824 = vsyncadd [#allocation3], 0
      %s1826 = sshll.u32 [#allocation2], 4
      %s1827 = int_to_ptr.vmem [resolvable:$true] %s1826
      %s1828 = sshll.u32 %s7, 4
      %s1829 = int_to_ptr.hbm [resolvable:$true] %s1828
      %1831 = dma.vmem_to_hbm [thread:$0]  %s1827, 32, %s1829, [#allocation3]
    $region33: #{net_tgcn_forward.1} parent=1 // pred_fallthru
      _
    // Predicated region
    $region34: #{net_tgcn_forward.1} parent=1 // pred_check
      _
    $region35: #{net_tgcn_forward.1} parent=1 // pred_check_branch
      %1833 = sbr.rel (0) target = $region37
    $region36: #{net_tgcn_forward.1} parent=1 // pred_region
      %1835 = dma.done [#allocation3], 32
    $region37: #{net_tgcn_forward.1} parent=1 // pred_fallthru
      _
    %1836 = vsyncpa [#allocation3], 1

</llo_original>
